<compile_context>
chip_gen: v6e
topology: v6e:2x2x1
jax: 0.10.0
libtpu: 0.0.40
codegen_flags: <defaults>
</compile_context>

<pallas_src>
import functools

import jax
import jax.numpy as jnp
from jax.experimental import pallas as pl
from jax.experimental.pallas import tpu as pltpu


# ----------------------------- fused 2-layer BiLSTM + head kernel -----------------------------
def _make_fused_kernel(T, B, H):
    H2, H4, H6, H8 = 2 * H, 4 * H, 6 * H, 8 * H

    def kernel(xaug_ref, w0_ref, whh0_ref, b0_ref, w1_ref, whh1_ref, b1_ref,
               fcw_ref, fcb_ref, outw_ref, outb_ref, o_ref, gx_ref, seq_ref):

        def run_layer(x_aug, w, whh, b):
            # Hoisted fused input projection for BOTH directions (single MXU op,
            # off the serial recurrence path).  Bias already folded (b_ih + b_hh).
            gx_ref[...] = jnp.dot(x_aug, w, preferred_element_type=jnp.float32) + b

            h = jnp.zeros((B, H2), jnp.float32)   # [h_fwd | h_rev]
            c = jnp.zeros((B, H2), jnp.float32)   # [c_fwd | c_rev]
            # TODO(synk): whh could be latched as a stationary MXU RHS via
            # pltpu.matmul_push_rhs/matmul_acc_lhs; left as jnp.dot (weight is VMEM-resident).
            for k in range(T):                    # statically unrolled recurrence
                gates = gx_ref[k * B:(k + 1) * B, :] + jnp.dot(
                    h, whh, preferred_element_type=jnp.float32)          # (B, 8H)
                sig = jax.nn.sigmoid(gates)       # ONE EUP pass: i/f/o of both directions
                i = sig[:, 0:H2]                  # [i_f | i_r]
                f = sig[:, H2:H4]                 # [f_f | f_r]
                g = jnp.tanh(gates[:, H4:H6])     # [g_f | g_r]
                o = sig[:, H6:H8]                 # [o_f | o_r]
                c = f * c + i * g
                h = o * jnp.tanh(c)               # h = [h_fwd(time=k) | h_rev(time=T-1-k)]
                # Build the augmented next-stage input in place:
                # row block t of seq_ref ends up as [h_step[t] | h_step[T-1-t]].
                seq_ref[k * B:(k + 1) * B, 0:H2] = h
                seq_ref[(T - 1 - k) * B:(T - k) * B, H2:H4] = h

        # ---- layer 0 ----
        run_layer(xaug_ref[...], w0_ref[...], whh0_ref[...], b0_ref[...])
        # ---- layer 1 (input = layer-0 augmented hidden sequence, stays in VMEM) ----
        x1 = seq_ref[...]                                                 # (T*B, 4H)
        run_layer(x1, w1_ref[...], whh1_ref[...], b1_ref[...])

        # ---- fused head: fc -> ReLU -> dropout(eval) -> linear -> sigmoid ----
        head_in = seq_ref[...]                                            # (T*B, 4H)
        hid = jnp.maximum(
            jnp.dot(head_in, fcw_ref[...], preferred_element_type=jnp.float32)
            + fcb_ref[...], 0.0)                                          # (T*B, 64)
        # TODO(synk): nn.Dropout is identity at inference; train-mode dropout not implemented.
        # 64 -> 1 projection as VPU multiply + lane reduction (no 1-column MXU matmul).
        z = jnp.sum(hid * outw_ref[...], axis=-1, keepdims=True) + outb_ref[...]
        o_ref[...] = jax.nn.sigmoid(z)                                    # (T*B, 1), ONE store

    return kernel


# ----------------------------- wrapper-side weight fusion -----------------------------
def _interleave_gates(wf, wr, H):
    """(..., 4H)+(..., 4H) in PyTorch gate order [i,f,g,o] ->
    (..., 8H) interleaved [i_f, i_r, f_f, f_r, g_f, g_r, o_f, o_r]."""
    parts = []
    for g in range(4):
        parts.append(wf[..., g * H:(g + 1) * H])
        parts.append(wr[..., g * H:(g + 1) * H])
    return jnp.concatenate(parts, axis=-1)


def _fuse_params(params, H):
    lstm = params["lstm"]
    assert len(lstm) == 2, "fused kernel is specialized for num_layers=2"

    def fuse_whh(layer):
        whh_f, whh_r = layer["whh"][0], layer["whh"][1]                  # (H, 4H)
        zH = jnp.zeros_like(whh_f)
        return jnp.concatenate([_interleave_gates(whh_f, zH, H),         # rows multiply h_fwd
                                _interleave_gates(zH, whh_r, H)],        # rows multiply h_rev
                               axis=0)                                   # (2H, 8H) block-diag

    def fuse_bias(layer):
        return _interleave_gates(layer["b"][0], layer["b"][1], H)        # (1, 8H)

    # layer 0: x_aug block t = [x(t) | x(T-1-t)]
    wih0_f, wih0_r = lstm[0]["wih"][0], lstm[0]["wih"][1]                # (D, 4H)
    zD = jnp.zeros_like(wih0_f)
    w0 = jnp.concatenate([_interleave_gates(wih0_f, zD, H),              # x(t)     -> fwd gates
                          _interleave_gates(zD, wih0_r, H)],             # x(T-1-t) -> rev gates
                         axis=0)                                         # (2D, 8H)

    # layer 1: x1_aug block t = [hf0(t), hr0(T-1-t), hf0(T-1-t), hr0(t)]
    wih1_f, wih1_r = lstm[1]["wih"][0], lstm[1]["wih"][1]                # (2H, 4H)
    zH4 = jnp.zeros((H, 4 * H), jnp.float32)
    w1 = jnp.concatenate([
        _interleave_gates(wih1_f[0:H], zH4, H),                          # hf0(t)     -> fwd gates
        _interleave_gates(zH4, wih1_r[H:2 * H], H),                      # hr0(T-1-t) -> rev gates
        _interleave_gates(zH4, wih1_r[0:H], H),                          # hf0(T-1-t) -> rev gates
        _interleave_gates(wih1_f[H:2 * H], zH4, H),                      # hr0(t)     -> fwd gates
    ], axis=0)                                                           # (4H, 8H)

    # head: fc absorbs the [hf1(t), hr1(T-1-t), hf1(T-1-t), hr1(t)] block layout
    fc_w = params["fc_w"]                                                # (2H, 64)
    zF = jnp.zeros((H, fc_w.shape[1]), jnp.float32)
    fc_w_aug = jnp.concatenate([fc_w[0:H], zF, zF, fc_w[H:2 * H]], axis=0)   # (4H, 64)

    return (w0, fuse_whh(lstm[0]), fuse_bias(lstm[0]),
            w1, fuse_whh(lstm[1]), fuse_bias(lstm[1]),
            fc_w_aug, params["fc_b"], params["out_w"], params["out_b"])


# ----------------------------- full forward -----------------------------
@functools.partial(jax.jit, static_argnums=(2,))
def bidirectional_lstm_forward(params, x_btd, hidden_size):
    H = hidden_size
    B, T, D = x_btd.shape
    # batch_first -> time-major rows (row = t*B + b); fold the reverse-direction time
    # reversal into the augmented input so the kernel never shuffles per step.
    x_tm = jnp.transpose(x_btd, (1, 0, 2)).astype(jnp.float32)           # (T, B, D)
    x_aug = jnp.concatenate([x_tm, x_tm[::-1]], axis=-1).reshape(T * B, 2 * D)
    fused = _fuse_params(params, H)
    y = pl.pallas_call(
        _make_fused_kernel(T, B, H),
        out_shape=jax.ShapeDtypeStruct((T * B, 1), jnp.float32),
        scratch_shapes=[
            pltpu.VMEM((T * B, 8 * H), jnp.float32),   # fused input-projection gates (reused)
            pltpu.VMEM((T * B, 4 * H), jnp.float32),   # augmented hidden-sequence buffer (reused)
        ],
    )(x_aug, *fused)
    return y.reshape(T, B).transpose(1, 0)             # (B, T) == sigmoid(out(...)).squeeze(-1)


# ----------------------------- deterministic parameter init -----------------------------
def init_params(key, input_size, hidden_size, num_layers=2):
    H = hidden_size
    keys = iter(jax.random.split(key, 8 * num_layers + 8))

    def u(shape, bound):
        return jax.random.uniform(next(keys), shape, jnp.float32, -bound, bound)

    lstm = []
    for l in range(num_layers):
        din = input_size if l == 0 else 2 * H
        bound = H ** -0.5
        wih = jnp.stack([u((din, 4 * H), bound), u((din, 4 * H), bound)])        # (2, din, 4H)
        whh = jnp.stack([u((H, 4 * H), bound), u((H, 4 * H), bound)])            # (2, H, 4H)
        b = jnp.stack([u((1, 4 * H), bound) + u((1, 4 * H), bound),              # b_ih + b_hh
                       u((1, 4 * H), bound) + u((1, 4 * H), bound)])             # (2, 1, 4H)
        lstm.append(dict(wih=wih, whh=whh, b=b))
    return dict(
        lstm=lstm,
        fc_w=u((2 * H, 64), (2 * H) ** -0.5),
        fc_b=u((1, 64), (2 * H) ** -0.5),
        out_w=u((1, 64), 64 ** -0.5),     # stored pre-transposed (row vector = W_out^T)
        out_b=u((1, 1), 64 ** -0.5),
    )


# ----------------------------- pure-JAX reference (for verification) -----------------------------
def _ref_lstm_dir(x_tbd, wih, whh, b, H, reverse):
    T, B, _ = x_tbd.shape
    xs = x_tbd[::-1] if reverse else x_tbd

    def step(carry, x_t):
        h, c = carry
        gates = x_t @ wih + h @ whh + b
        i = jax.nn.sigmoid(gates[:, :H])
        f = jax.nn.sigmoid(gates[:, H:2 * H])
        g = jnp.tanh(gates[:, 2 * H:3 * H])
        o = jax.nn.sigmoid(gates[:, 3 * H:])
        c = f * c + i * g
        h = o * jnp.tanh(c)
        return (h, c), h

    (_, _), hs = jax.lax.scan(step, (jnp.zeros((B, H)), jnp.zeros((B, H))), xs)
    return hs[::-1] if reverse else hs


def ref_forward(params, x_btd, hidden_size):
    H = hidden_size
    x = jnp.transpose(x_btd, (1, 0, 2)).astype(jnp.float32)      # (T, B, D)
    for layer in params["lstm"]:
        hf = _ref_lstm_dir(x, layer["wih"][0], layer["whh"][0], layer["b"][0], H, False)
        hr = _ref_lstm_dir(x, layer["wih"][1], layer["whh"][1], layer["b"][1], H, True)
        x = jnp.concatenate([hf, hr], axis=-1)                   # (T, B, 2H)
    h = jnp.maximum(x @ params["fc_w"] + params["fc_b"], 0.0)    # (T, B, 64)
    z = jnp.sum(h * params["out_w"], axis=-1) + params["out_b"][0, 0]
    return jnp.transpose(jax.nn.sigmoid(z), (1, 0))              # (B, T)


# ----------------------------- main -----------------------------
if __name__ == "__main__":
    B, T, D, H = 2, 8, 16, 32        # batch, seq_len, input_size, hidden_size
    key = jax.random.PRNGKey(0)
    kx, kp = jax.random.split(key)
    x = jax.random.normal(kx, (B, T, D), jnp.float32)
    params = init_params(kp, input_size=D, hidden_size=H, num_layers=2)

    out = jax.block_until_ready(bidirectional_lstm_forward(params, x, H))
    ref = ref_forward(params, x, H)

    assert out.shape == (B, T), out.shape
    err = float(jnp.max(jnp.abs(out - ref)))
    assert jnp.allclose(out, ref, atol=1e-5, rtol=1e-5), f"max err {err}"
    print("KERNEL_OK")
</pallas_src>

<mosaic_0001>
module attributes {stable_mosaic.version = 11 : i64} {
  func.func @kernel(%arg0: memref<16x32xf32, #tpu.memory_space<vmem>>, %arg1: memref<32x256xf32, #tpu.memory_space<vmem>>, %arg2: memref<64x256xf32, #tpu.memory_space<vmem>>, %arg3: memref<1x256xf32, #tpu.memory_space<vmem>>, %arg4: memref<128x256xf32, #tpu.memory_space<vmem>>, %arg5: memref<64x256xf32, #tpu.memory_space<vmem>>, %arg6: memref<1x256xf32, #tpu.memory_space<vmem>>, %arg7: memref<128x64xf32, #tpu.memory_space<vmem>>, %arg8: memref<1x64xf32, #tpu.memory_space<vmem>>, %arg9: memref<1x64xf32, #tpu.memory_space<vmem>>, %arg10: memref<1x1xf32, #tpu.memory_space<vmem>>, %arg11: memref<16x1xf32, #tpu.memory_space<vmem>>, %arg12: memref<16x256xf32, #tpu.memory_space<vmem>>, %arg13: memref<16x128xf32, #tpu.memory_space<vmem>>) attributes {dimension_semantics = [], scalar_prefetch = 0 : i64, scratch_operands = 2 : i64, tpu.core_type = #tpu.core_type<tc>} {
    %c0 = arith.constant 0 : index
    %c0_0 = arith.constant 0 : index
    %0 = vector.load %arg0[%c0, %c0_0] : memref<16x32xf32, #tpu.memory_space<vmem>>, vector<16x32xf32>
    %c0_1 = arith.constant 0 : index
    %c0_2 = arith.constant 0 : index
    %1 = vector.load %arg1[%c0_1, %c0_2] : memref<32x256xf32, #tpu.memory_space<vmem>>, vector<32x256xf32>
    %c0_3 = arith.constant 0 : index
    %c0_4 = arith.constant 0 : index
    %2 = vector.load %arg2[%c0_3, %c0_4] : memref<64x256xf32, #tpu.memory_space<vmem>>, vector<64x256xf32>
    %c0_5 = arith.constant 0 : index
    %c0_6 = arith.constant 0 : index
    %3 = vector.load %arg3[%c0_5, %c0_6] : memref<1x256xf32, #tpu.memory_space<vmem>>, vector<1x256xf32>
    %cst = arith.constant dense<0.000000e+00> : vector<16x256xf32>
    %4 = tpu.matmul %0, %1, %cst {dimension_numbers = #tpu.dot_dimension_numbers<[1], [0], [0], [1], [0, 0, 1, 1], [], []>} : vector<16x32xf32>, vector<32x256xf32>, vector<16x256xf32> -> vector<16x256xf32>
    %5 = vector.broadcast %3 : vector<1x256xf32> to vector<16x256xf32>
    %6 = arith.addf %4, %5 : vector<16x256xf32>
    %c0_7 = arith.constant 0 : index
    %c0_8 = arith.constant 0 : index
    %7 = vector.load %arg12[%c0_7, %c0_8] : memref<16x256xf32, #tpu.memory_space<vmem>>, vector<16x256xf32>
    tpu.vector_store %arg12[%c0_7, %c0_8], %6 {strides = array<i32>} : memref<16x256xf32, #tpu.memory_space<vmem>>, vector<16x256xf32>,
    %cst_9 = arith.constant 0.000000e+00 : f32
    %8 = vector.broadcast %cst_9 : f32 to vector<2x64xf32>
    %cst_10 = arith.constant 0.000000e+00 : f32
    %9 = vector.broadcast %cst_10 : f32 to vector<2x64xf32>
    %c0_11 = arith.constant 0 : index
    %c0_12 = arith.constant 0 : index
    %10 = vector.load %arg12[%c0_11, %c0_12] : memref<16x256xf32, #tpu.memory_space<vmem>>, vector<2x256xf32>
    %cst_13 = arith.constant dense<0.000000e+00> : vector<2x256xf32>
    %11 = tpu.matmul %8, %2, %cst_13 {dimension_numbers = #tpu.dot_dimension_numbers<[1], [0], [0], [1], [0, 0, 1, 1], [], []>} : vector<2x64xf32>, vector<64x256xf32>, vector<2x256xf32> -> vector<2x256xf32>
    %12 = arith.addf %10, %11 : vector<2x256xf32>
    %13 = arith.negf %12 : vector<2x256xf32>
    %14 = math.exp %13 : vector<2x256xf32>
    %cst_14 = arith.constant 1.000000e+00 : f32
    %15 = vector.broadcast %cst_14 : f32 to vector<2x256xf32>
    %16 = arith.addf %15, %14 : vector<2x256xf32>
    %17 = arith.divf %15, %16 : vector<2x256xf32>
    %18 = vector.extract_strided_slice %17 {offsets = [0, 0], sizes = [2, 64], strides = [1, 1]} : vector<2x256xf32> to vector<2x64xf32>
    %19 = vector.extract_strided_slice %17 {offsets = [0, 64], sizes = [2, 64], strides = [1, 1]} : vector<2x256xf32> to vector<2x64xf32>
    %20 = vector.extract_strided_slice %12 {offsets = [0, 128], sizes = [2, 64], strides = [1, 1]} : vector<2x256xf32> to vector<2x64xf32>
    %21 = math.tanh %20 : vector<2x64xf32>
    %22 = vector.extract_strided_slice %17 {offsets = [0, 192], sizes = [2, 64], strides = [1, 1]} : vector<2x256xf32> to vector<2x64xf32>
    %23 = arith.mulf %19, %9 : vector<2x64xf32>
    %24 = arith.mulf %18, %21 : vector<2x64xf32>
    %25 = arith.addf %23, %24 : vector<2x64xf32>
    %26 = math.tanh %25 : vector<2x64xf32>
    %27 = arith.mulf %22, %26 : vector<2x64xf32>
    %c0_15 = arith.constant 0 : index
    %c0_16 = arith.constant 0 : index
    %28 = vector.load %arg13[%c0_15, %c0_16] : memref<16x128xf32, #tpu.memory_space<vmem>>, vector<2x64xf32>
    tpu.vector_store %arg13[%c0_15, %c0_16], %27 {strides = array<i32>} : memref<16x128xf32, #tpu.memory_space<vmem>>, vector<2x64xf32>,
    %c14 = arith.constant 14 : index
    %c64 = arith.constant 64 : index
    %29 = vector.load %arg13[%c14, %c64] : memref<16x128xf32, #tpu.memory_space<vmem>>, vector<2x64xf32>
    tpu.vector_store %arg13[%c14, %c64], %27 {strides = array<i32>} : memref<16x128xf32, #tpu.memory_space<vmem>>, vector<2x64xf32>,
    %c2 = arith.constant 2 : index
    %c0_17 = arith.constant 0 : index
    %30 = vector.load %arg12[%c2, %c0_17] : memref<16x256xf32, #tpu.memory_space<vmem>>, vector<2x256xf32>
    %cst_18 = arith.constant dense<0.000000e+00> : vector<2x256xf32>
    %31 = tpu.matmul %27, %2, %cst_18 {dimension_numbers = #tpu.dot_dimension_numbers<[1], [0], [0], [1], [0, 0, 1, 1], [], []>} : vector<2x64xf32>, vector<64x256xf32>, vector<2x256xf32> -> vector<2x256xf32>
    %32 = arith.addf %30, %31 : vector<2x256xf32>
    %33 = arith.negf %32 : vector<2x256xf32>
    %34 = math.exp %33 : vector<2x256xf32>
    %cst_19 = arith.constant 1.000000e+00 : f32
    %35 = vector.broadcast %cst_19 : f32 to vector<2x256xf32>
    %36 = arith.addf %35, %34 : vector<2x256xf32>
    %37 = arith.divf %35, %36 : vector<2x256xf32>
    %38 = vector.extract_strided_slice %37 {offsets = [0, 0], sizes = [2, 64], strides = [1, 1]} : vector<2x256xf32> to vector<2x64xf32>
    %39 = vector.extract_strided_slice %37 {offsets = [0, 64], sizes = [2, 64], strides = [1, 1]} : vector<2x256xf32> to vector<2x64xf32>
    %40 = vector.extract_strided_slice %32 {offsets = [0, 128], sizes = [2, 64], strides = [1, 1]} : vector<2x256xf32> to vector<2x64xf32>
    %41 = math.tanh %40 : vector<2x64xf32>
    %42 = vector.extract_strided_slice %37 {offsets = [0, 192], sizes = [2, 64], strides = [1, 1]} : vector<2x256xf32> to vector<2x64xf32>
    %43 = arith.mulf %39, %25 : vector<2x64xf32>
    %44 = arith.mulf %38, %41 : vector<2x64xf32>
    %45 = arith.addf %43, %44 : vector<2x64xf32>
    %46 = math.tanh %45 : vector<2x64xf32>
    %47 = arith.mulf %42, %46 : vector<2x64xf32>
    %c2_20 = arith.constant 2 : index
    %c0_21 = arith.constant 0 : index
    %48 = vector.load %arg13[%c2_20, %c0_21] : memref<16x128xf32, #tpu.memory_space<vmem>>, vector<2x64xf32>
    tpu.vector_store %arg13[%c2_20, %c0_21], %47 {strides = array<i32>} : memref<16x128xf32, #tpu.memory_space<vmem>>, vector<2x64xf32>,
    %c12 = arith.constant 12 : index
    %c64_22 = arith.constant 64 : index
    %49 = vector.load %arg13[%c12, %c64_22] : memref<16x128xf32, #tpu.memory_space<vmem>>, vector<2x64xf32>
    tpu.vector_store %arg13[%c12, %c64_22], %47 {strides = array<i32>} : memref<16x128xf32, #tpu.memory_space<vmem>>, vector<2x64xf32>,
    %c4 = arith.constant 4 : index
    %c0_23 = arith.constant 0 : index
    %50 = vector.load %arg12[%c4, %c0_23] : memref<16x256xf32, #tpu.memory_space<vmem>>, vector<2x256xf32>
    %cst_24 = arith.constant dense<0.000000e+00> : vector<2x256xf32>
    %51 = tpu.matmul %47, %2, %cst_24 {dimension_numbers = #tpu.dot_dimension_numbers<[1], [0], [0], [1], [0, 0, 1, 1], [], []>} : vector<2x64xf32>, vector<64x256xf32>, vector<2x256xf32> -> vector<2x256xf32>
    %52 = arith.addf %50, %51 : vector<2x256xf32>
    %53 = arith.negf %52 : vector<2x256xf32>
    %54 = math.exp %53 : vector<2x256xf32>
    %cst_25 = arith.constant 1.000000e+00 : f32
    %55 = vector.broadcast %cst_25 : f32 to vector<2x256xf32>
    %56 = arith.addf %55, %54 : vector<2x256xf32>
    %57 = arith.divf %55, %56 : vector<2x256xf32>
    %58 = vector.extract_strided_slice %57 {offsets = [0, 0], sizes = [2, 64], strides = [1, 1]} : vector<2x256xf32> to vector<2x64xf32>
    %59 = vector.extract_strided_slice %57 {offsets = [0, 64], sizes = [2, 64], strides = [1, 1]} : vector<2x256xf32> to vector<2x64xf32>
    %60 = vector.extract_strided_slice %52 {offsets = [0, 128], sizes = [2, 64], strides = [1, 1]} : vector<2x256xf32> to vector<2x64xf32>
    %61 = math.tanh %60 : vector<2x64xf32>
    %62 = vector.extract_strided_slice %57 {offsets = [0, 192], sizes = [2, 64], strides = [1, 1]} : vector<2x256xf32> to vector<2x64xf32>
    %63 = arith.mulf %59, %45 : vector<2x64xf32>
    %64 = arith.mulf %58, %61 : vector<2x64xf32>
    %65 = arith.addf %63, %64 : vector<2x64xf32>
    %66 = math.tanh %65 : vector<2x64xf32>
    %67 = arith.mulf %62, %66 : vector<2x64xf32>
    %c4_26 = arith.constant 4 : index
    %c0_27 = arith.constant 0 : index
    %68 = vector.load %arg13[%c4_26, %c0_27] : memref<16x128xf32, #tpu.memory_space<vmem>>, vector<2x64xf32>
    tpu.vector_store %arg13[%c4_26, %c0_27], %67 {strides = array<i32>} : memref<16x128xf32, #tpu.memory_space<vmem>>, vector<2x64xf32>,
    %c10 = arith.constant 10 : index
    %c64_28 = arith.constant 64 : index
    %69 = vector.load %arg13[%c10, %c64_28] : memref<16x128xf32, #tpu.memory_space<vmem>>, vector<2x64xf32>
    tpu.vector_store %arg13[%c10, %c64_28], %67 {strides = array<i32>} : memref<16x128xf32, #tpu.memory_space<vmem>>, vector<2x64xf32>,
    %c6 = arith.constant 6 : index
    %c0_29 = arith.constant 0 : index
    %70 = vector.load %arg12[%c6, %c0_29] : memref<16x256xf32, #tpu.memory_space<vmem>>, vector<2x256xf32>
    %cst_30 = arith.constant dense<0.000000e+00> : vector<2x256xf32>
    %71 = tpu.matmul %67, %2, %cst_30 {dimension_numbers = #tpu.dot_dimension_numbers<[1], [0], [0], [1], [0, 0, 1, 1], [], []>} : vector<2x64xf32>, vector<64x256xf32>, vector<2x256xf32> -> vector<2x256xf32>
    %72 = arith.addf %70, %71 : vector<2x256xf32>
    %73 = arith.negf %72 : vector<2x256xf32>
    %74 = math.exp %73 : vector<2x256xf32>
    %cst_31 = arith.constant 1.000000e+00 : f32
    %75 = vector.broadcast %cst_31 : f32 to vector<2x256xf32>
    %76 = arith.addf %75, %74 : vector<2x256xf32>
    %77 = arith.divf %75, %76 : vector<2x256xf32>
    %78 = vector.extract_strided_slice %77 {offsets = [0, 0], sizes = [2, 64], strides = [1, 1]} : vector<2x256xf32> to vector<2x64xf32>
    %79 = vector.extract_strided_slice %77 {offsets = [0, 64], sizes = [2, 64], strides = [1, 1]} : vector<2x256xf32> to vector<2x64xf32>
    %80 = vector.extract_strided_slice %72 {offsets = [0, 128], sizes = [2, 64], strides = [1, 1]} : vector<2x256xf32> to vector<2x64xf32>
    %81 = math.tanh %80 : vector<2x64xf32>
    %82 = vector.extract_strided_slice %77 {offsets = [0, 192], sizes = [2, 64], strides = [1, 1]} : vector<2x256xf32> to vector<2x64xf32>
    %83 = arith.mulf %79, %65 : vector<2x64xf32>
    %84 = arith.mulf %78, %81 : vector<2x64xf32>
    %85 = arith.addf %83, %84 : vector<2x64xf32>
    %86 = math.tanh %85 : vector<2x64xf32>
    %87 = arith.mulf %82, %86 : vector<2x64xf32>
    %c6_32 = arith.constant 6 : index
    %c0_33 = arith.constant 0 : index
    %88 = vector.load %arg13[%c6_32, %c0_33] : memref<16x128xf32, #tpu.memory_space<vmem>>, vector<2x64xf32>
    tpu.vector_store %arg13[%c6_32, %c0_33], %87 {strides = array<i32>} : memref<16x128xf32, #tpu.memory_space<vmem>>, vector<2x64xf32>,
    %c8 = arith.constant 8 : index
    %c64_34 = arith.constant 64 : index
    %89 = vector.load %arg13[%c8, %c64_34] : memref<16x128xf32, #tpu.memory_space<vmem>>, vector<2x64xf32>
    tpu.vector_store %arg13[%c8, %c64_34], %87 {strides = array<i32>} : memref<16x128xf32, #tpu.memory_space<vmem>>, vector<2x64xf32>,
    %c8_35 = arith.constant 8 : index
    %c0_36 = arith.constant 0 : index
    %90 = vector.load %arg12[%c8_35, %c0_36] : memref<16x256xf32, #tpu.memory_space<vmem>>, vector<2x256xf32>
    %cst_37 = arith.constant dense<0.000000e+00> : vector<2x256xf32>
    %91 = tpu.matmul %87, %2, %cst_37 {dimension_numbers = #tpu.dot_dimension_numbers<[1], [0], [0], [1], [0, 0, 1, 1], [], []>} : vector<2x64xf32>, vector<64x256xf32>, vector<2x256xf32> -> vector<2x256xf32>
    %92 = arith.addf %90, %91 : vector<2x256xf32>
    %93 = arith.negf %92 : vector<2x256xf32>
    %94 = math.exp %93 : vector<2x256xf32>
    %cst_38 = arith.constant 1.000000e+00 : f32
    %95 = vector.broadcast %cst_38 : f32 to vector<2x256xf32>
    %96 = arith.addf %95, %94 : vector<2x256xf32>
    %97 = arith.divf %95, %96 : vector<2x256xf32>
    %98 = vector.extract_strided_slice %97 {offsets = [0, 0], sizes = [2, 64], strides = [1, 1]} : vector<2x256xf32> to vector<2x64xf32>
    %99 = vector.extract_strided_slice %97 {offsets = [0, 64], sizes = [2, 64], strides = [1, 1]} : vector<2x256xf32> to vector<2x64xf32>
    %100 = vector.extract_strided_slice %92 {offsets = [0, 128], sizes = [2, 64], strides = [1, 1]} : vector<2x256xf32> to vector<2x64xf32>
    %101 = math.tanh %100 : vector<2x64xf32>
    %102 = vector.extract_strided_slice %97 {offsets = [0, 192], sizes = [2, 64], strides = [1, 1]} : vector<2x256xf32> to vector<2x64xf32>
    %103 = arith.mulf %99, %85 : vector<2x64xf32>
    %104 = arith.mulf %98, %101 : vector<2x64xf32>
    %105 = arith.addf %103, %104 : vector<2x64xf32>
    %106 = math.tanh %105 : vector<2x64xf32>
    %107 = arith.mulf %102, %106 : vector<2x64xf32>
    %c8_39 = arith.constant 8 : index
    %c0_40 = arith.constant 0 : index
    %108 = vector.load %arg13[%c8_39, %c0_40] : memref<16x128xf32, #tpu.memory_space<vmem>>, vector<2x64xf32>
    tpu.vector_store %arg13[%c8_39, %c0_40], %107 {strides = array<i32>} : memref<16x128xf32, #tpu.memory_space<vmem>>, vector<2x64xf32>,
    %c6_41 = arith.constant 6 : index
    %c64_42 = arith.constant 64 : index
    %109 = vector.load %arg13[%c6_41, %c64_42] : memref<16x128xf32, #tpu.memory_space<vmem>>, vector<2x64xf32>
    tpu.vector_store %arg13[%c6_41, %c64_42], %107 {strides = array<i32>} : memref<16x128xf32, #tpu.memory_space<vmem>>, vector<2x64xf32>,
    %c10_43 = arith.constant 10 : index
    %c0_44 = arith.constant 0 : index
    %110 = vector.load %arg12[%c10_43, %c0_44] : memref<16x256xf32, #tpu.memory_space<vmem>>, vector<2x256xf32>
    %cst_45 = arith.constant dense<0.000000e+00> : vector<2x256xf32>
    %111 = tpu.matmul %107, %2, %cst_45 {dimension_numbers = #tpu.dot_dimension_numbers<[1], [0], [0], [1], [0, 0, 1, 1], [], []>} : vector<2x64xf32>, vector<64x256xf32>, vector<2x256xf32> -> vector<2x256xf32>
    %112 = arith.addf %110, %111 : vector<2x256xf32>
    %113 = arith.negf %112 : vector<2x256xf32>
    %114 = math.exp %113 : vector<2x256xf32>
    %cst_46 = arith.constant 1.000000e+00 : f32
    %115 = vector.broadcast %cst_46 : f32 to vector<2x256xf32>
    %116 = arith.addf %115, %114 : vector<2x256xf32>
    %117 = arith.divf %115, %116 : vector<2x256xf32>
    %118 = vector.extract_strided_slice %117 {offsets = [0, 0], sizes = [2, 64], strides = [1, 1]} : vector<2x256xf32> to vector<2x64xf32>
    %119 = vector.extract_strided_slice %117 {offsets = [0, 64], sizes = [2, 64], strides = [1, 1]} : vector<2x256xf32> to vector<2x64xf32>
    %120 = vector.extract_strided_slice %112 {offsets = [0, 128], sizes = [2, 64], strides = [1, 1]} : vector<2x256xf32> to vector<2x64xf32>
    %121 = math.tanh %120 : vector<2x64xf32>
    %122 = vector.extract_strided_slice %117 {offsets = [0, 192], sizes = [2, 64], strides = [1, 1]} : vector<2x256xf32> to vector<2x64xf32>
    %123 = arith.mulf %119, %105 : vector<2x64xf32>
    %124 = arith.mulf %118, %121 : vector<2x64xf32>
    %125 = arith.addf %123, %124 : vector<2x64xf32>
    %126 = math.tanh %125 : vector<2x64xf32>
    %127 = arith.mulf %122, %126 : vector<2x64xf32>
    %c10_47 = arith.constant 10 : index
    %c0_48 = arith.constant 0 : index
    %128 = vector.load %arg13[%c10_47, %c0_48] : memref<16x128xf32, #tpu.memory_space<vmem>>, vector<2x64xf32>
    tpu.vector_store %arg13[%c10_47, %c0_48], %127 {strides = array<i32>} : memref<16x128xf32, #tpu.memory_space<vmem>>, vector<2x64xf32>,
    %c4_49 = arith.constant 4 : index
    %c64_50 = arith.constant 64 : index
    %129 = vector.load %arg13[%c4_49, %c64_50] : memref<16x128xf32, #tpu.memory_space<vmem>>, vector<2x64xf32>
    tpu.vector_store %arg13[%c4_49, %c64_50], %127 {strides = array<i32>} : memref<16x128xf32, #tpu.memory_space<vmem>>, vector<2x64xf32>,
    %c12_51 = arith.constant 12 : index
    %c0_52 = arith.constant 0 : index
    %130 = vector.load %arg12[%c12_51, %c0_52] : memref<16x256xf32, #tpu.memory_space<vmem>>, vector<2x256xf32>
    %cst_53 = arith.constant dense<0.000000e+00> : vector<2x256xf32>
    %131 = tpu.matmul %127, %2, %cst_53 {dimension_numbers = #tpu.dot_dimension_numbers<[1], [0], [0], [1], [0, 0, 1, 1], [], []>} : vector<2x64xf32>, vector<64x256xf32>, vector<2x256xf32> -> vector<2x256xf32>
    %132 = arith.addf %130, %131 : vector<2x256xf32>
    %133 = arith.negf %132 : vector<2x256xf32>
    %134 = math.exp %133 : vector<2x256xf32>
    %cst_54 = arith.constant 1.000000e+00 : f32
    %135 = vector.broadcast %cst_54 : f32 to vector<2x256xf32>
    %136 = arith.addf %135, %134 : vector<2x256xf32>
    %137 = arith.divf %135, %136 : vector<2x256xf32>
    %138 = vector.extract_strided_slice %137 {offsets = [0, 0], sizes = [2, 64], strides = [1, 1]} : vector<2x256xf32> to vector<2x64xf32>
    %139 = vector.extract_strided_slice %137 {offsets = [0, 64], sizes = [2, 64], strides = [1, 1]} : vector<2x256xf32> to vector<2x64xf32>
    %140 = vector.extract_strided_slice %132 {offsets = [0, 128], sizes = [2, 64], strides = [1, 1]} : vector<2x256xf32> to vector<2x64xf32>
    %141 = math.tanh %140 : vector<2x64xf32>
    %142 = vector.extract_strided_slice %137 {offsets = [0, 192], sizes = [2, 64], strides = [1, 1]} : vector<2x256xf32> to vector<2x64xf32>
    %143 = arith.mulf %139, %125 : vector<2x64xf32>
    %144 = arith.mulf %138, %141 : vector<2x64xf32>
    %145 = arith.addf %143, %144 : vector<2x64xf32>
    %146 = math.tanh %145 : vector<2x64xf32>
    %147 = arith.mulf %142, %146 : vector<2x64xf32>
    %c12_55 = arith.constant 12 : index
    %c0_56 = arith.constant 0 : index
    %148 = vector.load %arg13[%c12_55, %c0_56] : memref<16x128xf32, #tpu.memory_space<vmem>>, vector<2x64xf32>
    tpu.vector_store %arg13[%c12_55, %c0_56], %147 {strides = array<i32>} : memref<16x128xf32, #tpu.memory_space<vmem>>, vector<2x64xf32>,
    %c2_57 = arith.constant 2 : index
    %c64_58 = arith.constant 64 : index
    %149 = vector.load %arg13[%c2_57, %c64_58] : memref<16x128xf32, #tpu.memory_space<vmem>>, vector<2x64xf32>
    tpu.vector_store %arg13[%c2_57, %c64_58], %147 {strides = array<i32>} : memref<16x128xf32, #tpu.memory_space<vmem>>, vector<2x64xf32>,
    %c14_59 = arith.constant 14 : index
    %c0_60 = arith.constant 0 : index
    %150 = vector.load %arg12[%c14_59, %c0_60] : memref<16x256xf32, #tpu.memory_space<vmem>>, vector<2x256xf32>
    %cst_61 = arith.constant dense<0.000000e+00> : vector<2x256xf32>
    %151 = tpu.matmul %147, %2, %cst_61 {dimension_numbers = #tpu.dot_dimension_numbers<[1], [0], [0], [1], [0, 0, 1, 1], [], []>} : vector<2x64xf32>, vector<64x256xf32>, vector<2x256xf32> -> vector<2x256xf32>
    %152 = arith.addf %150, %151 : vector<2x256xf32>
    %153 = arith.negf %152 : vector<2x256xf32>
    %154 = math.exp %153 : vector<2x256xf32>
    %cst_62 = arith.constant 1.000000e+00 : f32
    %155 = vector.broadcast %cst_62 : f32 to vector<2x256xf32>
    %156 = arith.addf %155, %154 : vector<2x256xf32>
    %157 = arith.divf %155, %156 : vector<2x256xf32>
    %158 = vector.extract_strided_slice %157 {offsets = [0, 0], sizes = [2, 64], strides = [1, 1]} : vector<2x256xf32> to vector<2x64xf32>
    %159 = vector.extract_strided_slice %157 {offsets = [0, 64], sizes = [2, 64], strides = [1, 1]} : vector<2x256xf32> to vector<2x64xf32>
    %160 = vector.extract_strided_slice %152 {offsets = [0, 128], sizes = [2, 64], strides = [1, 1]} : vector<2x256xf32> to vector<2x64xf32>
    %161 = math.tanh %160 : vector<2x64xf32>
    %162 = vector.extract_strided_slice %157 {offsets = [0, 192], sizes = [2, 64], strides = [1, 1]} : vector<2x256xf32> to vector<2x64xf32>
    %163 = arith.mulf %159, %145 : vector<2x64xf32>
    %164 = arith.mulf %158, %161 : vector<2x64xf32>
    %165 = arith.addf %163, %164 : vector<2x64xf32>
    %166 = math.tanh %165 : vector<2x64xf32>
    %167 = arith.mulf %162, %166 : vector<2x64xf32>
    %c14_63 = arith.constant 14 : index
    %c0_64 = arith.constant 0 : index
    %168 = vector.load %arg13[%c14_63, %c0_64] : memref<16x128xf32, #tpu.memory_space<vmem>>, vector<2x64xf32>
    tpu.vector_store %arg13[%c14_63, %c0_64], %167 {strides = array<i32>} : memref<16x128xf32, #tpu.memory_space<vmem>>, vector<2x64xf32>,
    %c0_65 = arith.constant 0 : index
    %c64_66 = arith.constant 64 : index
    %169 = vector.load %arg13[%c0_65, %c64_66] : memref<16x128xf32, #tpu.memory_space<vmem>>, vector<2x64xf32>
    tpu.vector_store %arg13[%c0_65, %c64_66], %167 {strides = array<i32>} : memref<16x128xf32, #tpu.memory_space<vmem>>, vector<2x64xf32>,
    %c0_67 = arith.constant 0 : index
    %c0_68 = arith.constant 0 : index
    %170 = vector.load %arg13[%c0_67, %c0_68] : memref<16x128xf32, #tpu.memory_space<vmem>>, vector<16x128xf32>
    %c0_69 = arith.constant 0 : index
    %c0_70 = arith.constant 0 : index
    %171 = vector.load %arg4[%c0_69, %c0_70] : memref<128x256xf32, #tpu.memory_space<vmem>>, vector<128x256xf32>
    %c0_71 = arith.constant 0 : index
    %c0_72 = arith.constant 0 : index
    %172 = vector.load %arg5[%c0_71, %c0_72] : memref<64x256xf32, #tpu.memory_space<vmem>>, vector<64x256xf32>
    %c0_73 = arith.constant 0 : index
    %c0_74 = arith.constant 0 : index
    %173 = vector.load %arg6[%c0_73, %c0_74] : memref<1x256xf32, #tpu.memory_space<vmem>>, vector<1x256xf32>
    %cst_75 = arith.constant dense<0.000000e+00> : vector<16x256xf32>
    %174 = tpu.matmul %170, %171, %cst_75 {dimension_numbers = #tpu.dot_dimension_numbers<[1], [0], [0], [1], [0, 0, 1, 1], [], []>} : vector<16x128xf32>, vector<128x256xf32>, vector<16x256xf32> -> vector<16x256xf32>
    %175 = vector.broadcast %173 : vector<1x256xf32> to vector<16x256xf32>
    %176 = arith.addf %174, %175 : vector<16x256xf32>
    %c0_76 = arith.constant 0 : index
    %c0_77 = arith.constant 0 : index
    %177 = vector.load %arg12[%c0_76, %c0_77] : memref<16x256xf32, #tpu.memory_space<vmem>>, vector<16x256xf32>
    tpu.vector_store %arg12[%c0_76, %c0_77], %176 {strides = array<i32>} : memref<16x256xf32, #tpu.memory_space<vmem>>, vector<16x256xf32>,
    %cst_78 = arith.constant 0.000000e+00 : f32
    %178 = vector.broadcast %cst_78 : f32 to vector<2x64xf32>
    %cst_79 = arith.constant 0.000000e+00 : f32
    %179 = vector.broadcast %cst_79 : f32 to vector<2x64xf32>
    %c0_80 = arith.constant 0 : index
    %c0_81 = arith.constant 0 : index
    %180 = vector.load %arg12[%c0_80, %c0_81] : memref<16x256xf32, #tpu.memory_space<vmem>>, vector<2x256xf32>
    %cst_82 = arith.constant dense<0.000000e+00> : vector<2x256xf32>
    %181 = tpu.matmul %178, %172, %cst_82 {dimension_numbers = #tpu.dot_dimension_numbers<[1], [0], [0], [1], [0, 0, 1, 1], [], []>} : vector<2x64xf32>, vector<64x256xf32>, vector<2x256xf32> -> vector<2x256xf32>
    %182 = arith.addf %180, %181 : vector<2x256xf32>
    %183 = arith.negf %182 : vector<2x256xf32>
    %184 = math.exp %183 : vector<2x256xf32>
    %cst_83 = arith.constant 1.000000e+00 : f32
    %185 = vector.broadcast %cst_83 : f32 to vector<2x256xf32>
    %186 = arith.addf %185, %184 : vector<2x256xf32>
    %187 = arith.divf %185, %186 : vector<2x256xf32>
    %188 = vector.extract_strided_slice %187 {offsets = [0, 0], sizes = [2, 64], strides = [1, 1]} : vector<2x256xf32> to vector<2x64xf32>
    %189 = vector.extract_strided_slice %187 {offsets = [0, 64], sizes = [2, 64], strides = [1, 1]} : vector<2x256xf32> to vector<2x64xf32>
    %190 = vector.extract_strided_slice %182 {offsets = [0, 128], sizes = [2, 64], strides = [1, 1]} : vector<2x256xf32> to vector<2x64xf32>
    %191 = math.tanh %190 : vector<2x64xf32>
    %192 = vector.extract_strided_slice %187 {offsets = [0, 192], sizes = [2, 64], strides = [1, 1]} : vector<2x256xf32> to vector<2x64xf32>
    %193 = arith.mulf %189, %179 : vector<2x64xf32>
    %194 = arith.mulf %188, %191 : vector<2x64xf32>
    %195 = arith.addf %193, %194 : vector<2x64xf32>
    %196 = math.tanh %195 : vector<2x64xf32>
    %197 = arith.mulf %192, %196 : vector<2x64xf32>
    %c0_84 = arith.constant 0 : index
    %c0_85 = arith.constant 0 : index
    %198 = vector.load %arg13[%c0_84, %c0_85] : memref<16x128xf32, #tpu.memory_space<vmem>>, vector<2x64xf32>
    tpu.vector_store %arg13[%c0_84, %c0_85], %197 {strides = array<i32>} : memref<16x128xf32, #tpu.memory_space<vmem>>, vector<2x64xf32>,
    %c14_86 = arith.constant 14 : index
    %c64_87 = arith.constant 64 : index
    %199 = vector.load %arg13[%c14_86, %c64_87] : memref<16x128xf32, #tpu.memory_space<vmem>>, vector<2x64xf32>
    tpu.vector_store %arg13[%c14_86, %c64_87], %197 {strides = array<i32>} : memref<16x128xf32, #tpu.memory_space<vmem>>, vector<2x64xf32>,
    %c2_88 = arith.constant 2 : index
    %c0_89 = arith.constant 0 : index
    %200 = vector.load %arg12[%c2_88, %c0_89] : memref<16x256xf32, #tpu.memory_space<vmem>>, vector<2x256xf32>
    %cst_90 = arith.constant dense<0.000000e+00> : vector<2x256xf32>
    %201 = tpu.matmul %197, %172, %cst_90 {dimension_numbers = #tpu.dot_dimension_numbers<[1], [0], [0], [1], [0, 0, 1, 1], [], []>} : vector<2x64xf32>, vector<64x256xf32>, vector<2x256xf32> -> vector<2x256xf32>
    %202 = arith.addf %200, %201 : vector<2x256xf32>
    %203 = arith.negf %202 : vector<2x256xf32>
    %204 = math.exp %203 : vector<2x256xf32>
    %cst_91 = arith.constant 1.000000e+00 : f32
    %205 = vector.broadcast %cst_91 : f32 to vector<2x256xf32>
    %206 = arith.addf %205, %204 : vector<2x256xf32>
    %207 = arith.divf %205, %206 : vector<2x256xf32>
    %208 = vector.extract_strided_slice %207 {offsets = [0, 0], sizes = [2, 64], strides = [1, 1]} : vector<2x256xf32> to vector<2x64xf32>
    %209 = vector.extract_strided_slice %207 {offsets = [0, 64], sizes = [2, 64], strides = [1, 1]} : vector<2x256xf32> to vector<2x64xf32>
    %210 = vector.extract_strided_slice %202 {offsets = [0, 128], sizes = [2, 64], strides = [1, 1]} : vector<2x256xf32> to vector<2x64xf32>
    %211 = math.tanh %210 : vector<2x64xf32>
    %212 = vector.extract_strided_slice %207 {offsets = [0, 192], sizes = [2, 64], strides = [1, 1]} : vector<2x256xf32> to vector<2x64xf32>
    %213 = arith.mulf %209, %195 : vector<2x64xf32>
    %214 = arith.mulf %208, %211 : vector<2x64xf32>
    %215 = arith.addf %213, %214 : vector<2x64xf32>
    %216 = math.tanh %215 : vector<2x64xf32>
    %217 = arith.mulf %212, %216 : vector<2x64xf32>
    %c2_92 = arith.constant 2 : index
    %c0_93 = arith.constant 0 : index
    %218 = vector.load %arg13[%c2_92, %c0_93] : memref<16x128xf32, #tpu.memory_space<vmem>>, vector<2x64xf32>
    tpu.vector_store %arg13[%c2_92, %c0_93], %217 {strides = array<i32>} : memref<16x128xf32, #tpu.memory_space<vmem>>, vector<2x64xf32>,
    %c12_94 = arith.constant 12 : index
    %c64_95 = arith.constant 64 : index
    %219 = vector.load %arg13[%c12_94, %c64_95] : memref<16x128xf32, #tpu.memory_space<vmem>>, vector<2x64xf32>
    tpu.vector_store %arg13[%c12_94, %c64_95], %217 {strides = array<i32>} : memref<16x128xf32, #tpu.memory_space<vmem>>, vector<2x64xf32>,
    %c4_96 = arith.constant 4 : index
    %c0_97 = arith.constant 0 : index
    %220 = vector.load %arg12[%c4_96, %c0_97] : memref<16x256xf32, #tpu.memory_space<vmem>>, vector<2x256xf32>
    %cst_98 = arith.constant dense<0.000000e+00> : vector<2x256xf32>
    %221 = tpu.matmul %217, %172, %cst_98 {dimension_numbers = #tpu.dot_dimension_numbers<[1], [0], [0], [1], [0, 0, 1, 1], [], []>} : vector<2x64xf32>, vector<64x256xf32>, vector<2x256xf32> -> vector<2x256xf32>
    %222 = arith.addf %220, %221 : vector<2x256xf32>
    %223 = arith.negf %222 : vector<2x256xf32>
    %224 = math.exp %223 : vector<2x256xf32>
    %cst_99 = arith.constant 1.000000e+00 : f32
    %225 = vector.broadcast %cst_99 : f32 to vector<2x256xf32>
    %226 = arith.addf %225, %224 : vector<2x256xf32>
    %227 = arith.divf %225, %226 : vector<2x256xf32>
    %228 = vector.extract_strided_slice %227 {offsets = [0, 0], sizes = [2, 64], strides = [1, 1]} : vector<2x256xf32> to vector<2x64xf32>
    %229 = vector.extract_strided_slice %227 {offsets = [0, 64], sizes = [2, 64], strides = [1, 1]} : vector<2x256xf32> to vector<2x64xf32>
    %230 = vector.extract_strided_slice %222 {offsets = [0, 128], sizes = [2, 64], strides = [1, 1]} : vector<2x256xf32> to vector<2x64xf32>
    %231 = math.tanh %230 : vector<2x64xf32>
    %232 = vector.extract_strided_slice %227 {offsets = [0, 192], sizes = [2, 64], strides = [1, 1]} : vector<2x256xf32> to vector<2x64xf32>
    %233 = arith.mulf %229, %215 : vector<2x64xf32>
    %234 = arith.mulf %228, %231 : vector<2x64xf32>
    %235 = arith.addf %233, %234 : vector<2x64xf32>
    %236 = math.tanh %235 : vector<2x64xf32>
    %237 = arith.mulf %232, %236 : vector<2x64xf32>
    %c4_100 = arith.constant 4 : index
    %c0_101 = arith.constant 0 : index
    %238 = vector.load %arg13[%c4_100, %c0_101] : memref<16x128xf32, #tpu.memory_space<vmem>>, vector<2x64xf32>
    tpu.vector_store %arg13[%c4_100, %c0_101], %237 {strides = array<i32>} : memref<16x128xf32, #tpu.memory_space<vmem>>, vector<2x64xf32>,
    %c10_102 = arith.constant 10 : index
    %c64_103 = arith.constant 64 : index
    %239 = vector.load %arg13[%c10_102, %c64_103] : memref<16x128xf32, #tpu.memory_space<vmem>>, vector<2x64xf32>
    tpu.vector_store %arg13[%c10_102, %c64_103], %237 {strides = array<i32>} : memref<16x128xf32, #tpu.memory_space<vmem>>, vector<2x64xf32>,
    %c6_104 = arith.constant 6 : index
    %c0_105 = arith.constant 0 : index
    %240 = vector.load %arg12[%c6_104, %c0_105] : memref<16x256xf32, #tpu.memory_space<vmem>>, vector<2x256xf32>
    %cst_106 = arith.constant dense<0.000000e+00> : vector<2x256xf32>
    %241 = tpu.matmul %237, %172, %cst_106 {dimension_numbers = #tpu.dot_dimension_numbers<[1], [0], [0], [1], [0, 0, 1, 1], [], []>} : vector<2x64xf32>, vector<64x256xf32>, vector<2x256xf32> -> vector<2x256xf32>
    %242 = arith.addf %240, %241 : vector<2x256xf32>
    %243 = arith.negf %242 : vector<2x256xf32>
    %244 = math.exp %243 : vector<2x256xf32>
    %cst_107 = arith.constant 1.000000e+00 : f32
    %245 = vector.broadcast %cst_107 : f32 to vector<2x256xf32>
    %246 = arith.addf %245, %244 : vector<2x256xf32>
    %247 = arith.divf %245, %246 : vector<2x256xf32>
    %248 = vector.extract_strided_slice %247 {offsets = [0, 0], sizes = [2, 64], strides = [1, 1]} : vector<2x256xf32> to vector<2x64xf32>
    %249 = vector.extract_strided_slice %247 {offsets = [0, 64], sizes = [2, 64], strides = [1, 1]} : vector<2x256xf32> to vector<2x64xf32>
    %250 = vector.extract_strided_slice %242 {offsets = [0, 128], sizes = [2, 64], strides = [1, 1]} : vector<2x256xf32> to vector<2x64xf32>
    %251 = math.tanh %250 : vector<2x64xf32>
    %252 = vector.extract_strided_slice %247 {offsets = [0, 192], sizes = [2, 64], strides = [1, 1]} : vector<2x256xf32> to vector<2x64xf32>
    %253 = arith.mulf %249, %235 : vector<2x64xf32>
    %254 = arith.mulf %248, %251 : vector<2x64xf32>
    %255 = arith.addf %253, %254 : vector<2x64xf32>
    %256 = math.tanh %255 : vector<2x64xf32>
    %257 = arith.mulf %252, %256 : vector<2x64xf32>
    %c6_108 = arith.constant 6 : index
    %c0_109 = arith.constant 0 : index
    %258 = vector.load %arg13[%c6_108, %c0_109] : memref<16x128xf32, #tpu.memory_space<vmem>>, vector<2x64xf32>
    tpu.vector_store %arg13[%c6_108, %c0_109], %257 {strides = array<i32>} : memref<16x128xf32, #tpu.memory_space<vmem>>, vector<2x64xf32>,
    %c8_110 = arith.constant 8 : index
    %c64_111 = arith.constant 64 : index
    %259 = vector.load %arg13[%c8_110, %c64_111] : memref<16x128xf32, #tpu.memory_space<vmem>>, vector<2x64xf32>
    tpu.vector_store %arg13[%c8_110, %c64_111], %257 {strides = array<i32>} : memref<16x128xf32, #tpu.memory_space<vmem>>, vector<2x64xf32>,
    %c8_112 = arith.constant 8 : index
    %c0_113 = arith.constant 0 : index
    %260 = vector.load %arg12[%c8_112, %c0_113] : memref<16x256xf32, #tpu.memory_space<vmem>>, vector<2x256xf32>
    %cst_114 = arith.constant dense<0.000000e+00> : vector<2x256xf32>
    %261 = tpu.matmul %257, %172, %cst_114 {dimension_numbers = #tpu.dot_dimension_numbers<[1], [0], [0], [1], [0, 0, 1, 1], [], []>} : vector<2x64xf32>, vector<64x256xf32>, vector<2x256xf32> -> vector<2x256xf32>
    %262 = arith.addf %260, %261 : vector<2x256xf32>
    %263 = arith.negf %262 : vector<2x256xf32>
    %264 = math.exp %263 : vector<2x256xf32>
    %cst_115 = arith.constant 1.000000e+00 : f32
    %265 = vector.broadcast %cst_115 : f32 to vector<2x256xf32>
    %266 = arith.addf %265, %264 : vector<2x256xf32>
    %267 = arith.divf %265, %266 : vector<2x256xf32>
    %268 = vector.extract_strided_slice %267 {offsets = [0, 0], sizes = [2, 64], strides = [1, 1]} : vector<2x256xf32> to vector<2x64xf32>
    %269 = vector.extract_strided_slice %267 {offsets = [0, 64], sizes = [2, 64], strides = [1, 1]} : vector<2x256xf32> to vector<2x64xf32>
    %270 = vector.extract_strided_slice %262 {offsets = [0, 128], sizes = [2, 64], strides = [1, 1]} : vector<2x256xf32> to vector<2x64xf32>
    %271 = math.tanh %270 : vector<2x64xf32>
    %272 = vector.extract_strided_slice %267 {offsets = [0, 192], sizes = [2, 64], strides = [1, 1]} : vector<2x256xf32> to vector<2x64xf32>
    %273 = arith.mulf %269, %255 : vector<2x64xf32>
    %274 = arith.mulf %268, %271 : vector<2x64xf32>
    %275 = arith.addf %273, %274 : vector<2x64xf32>
    %276 = math.tanh %275 : vector<2x64xf32>
    %277 = arith.mulf %272, %276 : vector<2x64xf32>
    %c8_116 = arith.constant 8 : index
    %c0_117 = arith.constant 0 : index
    %278 = vector.load %arg13[%c8_116, %c0_117] : memref<16x128xf32, #tpu.memory_space<vmem>>, vector<2x64xf32>
    tpu.vector_store %arg13[%c8_116, %c0_117], %277 {strides = array<i32>} : memref<16x128xf32, #tpu.memory_space<vmem>>, vector<2x64xf32>,
    %c6_118 = arith.constant 6 : index
    %c64_119 = arith.constant 64 : index
    %279 = vector.load %arg13[%c6_118, %c64_119] : memref<16x128xf32, #tpu.memory_space<vmem>>, vector<2x64xf32>
    tpu.vector_store %arg13[%c6_118, %c64_119], %277 {strides = array<i32>} : memref<16x128xf32, #tpu.memory_space<vmem>>, vector<2x64xf32>,
    %c10_120 = arith.constant 10 : index
    %c0_121 = arith.constant 0 : index
    %280 = vector.load %arg12[%c10_120, %c0_121] : memref<16x256xf32, #tpu.memory_space<vmem>>, vector<2x256xf32>
    %cst_122 = arith.constant dense<0.000000e+00> : vector<2x256xf32>
    %281 = tpu.matmul %277, %172, %cst_122 {dimension_numbers = #tpu.dot_dimension_numbers<[1], [0], [0], [1], [0, 0, 1, 1], [], []>} : vector<2x64xf32>, vector<64x256xf32>, vector<2x256xf32> -> vector<2x256xf32>
    %282 = arith.addf %280, %281 : vector<2x256xf32>
    %283 = arith.negf %282 : vector<2x256xf32>
    %284 = math.exp %283 : vector<2x256xf32>
    %cst_123 = arith.constant 1.000000e+00 : f32
    %285 = vector.broadcast %cst_123 : f32 to vector<2x256xf32>
    %286 = arith.addf %285, %284 : vector<2x256xf32>
    %287 = arith.divf %285, %286 : vector<2x256xf32>
    %288 = vector.extract_strided_slice %287 {offsets = [0, 0], sizes = [2, 64], strides = [1, 1]} : vector<2x256xf32> to vector<2x64xf32>
    %289 = vector.extract_strided_slice %287 {offsets = [0, 64], sizes = [2, 64], strides = [1, 1]} : vector<2x256xf32> to vector<2x64xf32>
    %290 = vector.extract_strided_slice %282 {offsets = [0, 128], sizes = [2, 64], strides = [1, 1]} : vector<2x256xf32> to vector<2x64xf32>
    %291 = math.tanh %290 : vector<2x64xf32>
    %292 = vector.extract_strided_slice %287 {offsets = [0, 192], sizes = [2, 64], strides = [1, 1]} : vector<2x256xf32> to vector<2x64xf32>
    %293 = arith.mulf %289, %275 : vector<2x64xf32>
    %294 = arith.mulf %288, %291 : vector<2x64xf32>
    %295 = arith.addf %293, %294 : vector<2x64xf32>
    %296 = math.tanh %295 : vector<2x64xf32>
    %297 = arith.mulf %292, %296 : vector<2x64xf32>
    %c10_124 = arith.constant 10 : index
    %c0_125 = arith.constant 0 : index
    %298 = vector.load %arg13[%c10_124, %c0_125] : memref<16x128xf32, #tpu.memory_space<vmem>>, vector<2x64xf32>
    tpu.vector_store %arg13[%c10_124, %c0_125], %297 {strides = array<i32>} : memref<16x128xf32, #tpu.memory_space<vmem>>, vector<2x64xf32>,
    %c4_126 = arith.constant 4 : index
    %c64_127 = arith.constant 64 : index
    %299 = vector.load %arg13[%c4_126, %c64_127] : memref<16x128xf32, #tpu.memory_space<vmem>>, vector<2x64xf32>
    tpu.vector_store %arg13[%c4_126, %c64_127], %297 {strides = array<i32>} : memref<16x128xf32, #tpu.memory_space<vmem>>, vector<2x64xf32>,
    %c12_128 = arith.constant 12 : index
    %c0_129 = arith.constant 0 : index
    %300 = vector.load %arg12[%c12_128, %c0_129] : memref<16x256xf32, #tpu.memory_space<vmem>>, vector<2x256xf32>
    %cst_130 = arith.constant dense<0.000000e+00> : vector<2x256xf32>
    %301 = tpu.matmul %297, %172, %cst_130 {dimension_numbers = #tpu.dot_dimension_numbers<[1], [0], [0], [1], [0, 0, 1, 1], [], []>} : vector<2x64xf32>, vector<64x256xf32>, vector<2x256xf32> -> vector<2x256xf32>
    %302 = arith.addf %300, %301 : vector<2x256xf32>
    %303 = arith.negf %302 : vector<2x256xf32>
    %304 = math.exp %303 : vector<2x256xf32>
    %cst_131 = arith.constant 1.000000e+00 : f32
    %305 = vector.broadcast %cst_131 : f32 to vector<2x256xf32>
    %306 = arith.addf %305, %304 : vector<2x256xf32>
    %307 = arith.divf %305, %306 : vector<2x256xf32>
    %308 = vector.extract_strided_slice %307 {offsets = [0, 0], sizes = [2, 64], strides = [1, 1]} : vector<2x256xf32> to vector<2x64xf32>
    %309 = vector.extract_strided_slice %307 {offsets = [0, 64], sizes = [2, 64], strides = [1, 1]} : vector<2x256xf32> to vector<2x64xf32>
    %310 = vector.extract_strided_slice %302 {offsets = [0, 128], sizes = [2, 64], strides = [1, 1]} : vector<2x256xf32> to vector<2x64xf32>
    %311 = math.tanh %310 : vector<2x64xf32>
    %312 = vector.extract_strided_slice %307 {offsets = [0, 192], sizes = [2, 64], strides = [1, 1]} : vector<2x256xf32> to vector<2x64xf32>
    %313 = arith.mulf %309, %295 : vector<2x64xf32>
    %314 = arith.mulf %308, %311 : vector<2x64xf32>
    %315 = arith.addf %313, %314 : vector<2x64xf32>
    %316 = math.tanh %315 : vector<2x64xf32>
    %317 = arith.mulf %312, %316 : vector<2x64xf32>
    %c12_132 = arith.constant 12 : index
    %c0_133 = arith.constant 0 : index
    %318 = vector.load %arg13[%c12_132, %c0_133] : memref<16x128xf32, #tpu.memory_space<vmem>>, vector<2x64xf32>
    tpu.vector_store %arg13[%c12_132, %c0_133], %317 {strides = array<i32>} : memref<16x128xf32, #tpu.memory_space<vmem>>, vector<2x64xf32>,
    %c2_134 = arith.constant 2 : index
    %c64_135 = arith.constant 64 : index
    %319 = vector.load %arg13[%c2_134, %c64_135] : memref<16x128xf32, #tpu.memory_space<vmem>>, vector<2x64xf32>
    tpu.vector_store %arg13[%c2_134, %c64_135], %317 {strides = array<i32>} : memref<16x128xf32, #tpu.memory_space<vmem>>, vector<2x64xf32>,
    %c14_136 = arith.constant 14 : index
    %c0_137 = arith.constant 0 : index
    %320 = vector.load %arg12[%c14_136, %c0_137] : memref<16x256xf32, #tpu.memory_space<vmem>>, vector<2x256xf32>
    %cst_138 = arith.constant dense<0.000000e+00> : vector<2x256xf32>
    %321 = tpu.matmul %317, %172, %cst_138 {dimension_numbers = #tpu.dot_dimension_numbers<[1], [0], [0], [1], [0, 0, 1, 1], [], []>} : vector<2x64xf32>, vector<64x256xf32>, vector<2x256xf32> -> vector<2x256xf32>
    %322 = arith.addf %320, %321 : vector<2x256xf32>
    %323 = arith.negf %322 : vector<2x256xf32>
    %324 = math.exp %323 : vector<2x256xf32>
    %cst_139 = arith.constant 1.000000e+00 : f32
    %325 = vector.broadcast %cst_139 : f32 to vector<2x256xf32>
    %326 = arith.addf %325, %324 : vector<2x256xf32>
    %327 = arith.divf %325, %326 : vector<2x256xf32>
    %328 = vector.extract_strided_slice %327 {offsets = [0, 0], sizes = [2, 64], strides = [1, 1]} : vector<2x256xf32> to vector<2x64xf32>
    %329 = vector.extract_strided_slice %327 {offsets = [0, 64], sizes = [2, 64], strides = [1, 1]} : vector<2x256xf32> to vector<2x64xf32>
    %330 = vector.extract_strided_slice %322 {offsets = [0, 128], sizes = [2, 64], strides = [1, 1]} : vector<2x256xf32> to vector<2x64xf32>
    %331 = math.tanh %330 : vector<2x64xf32>
    %332 = vector.extract_strided_slice %327 {offsets = [0, 192], sizes = [2, 64], strides = [1, 1]} : vector<2x256xf32> to vector<2x64xf32>
    %333 = arith.mulf %329, %315 : vector<2x64xf32>
    %334 = arith.mulf %328, %331 : vector<2x64xf32>
    %335 = arith.addf %333, %334 : vector<2x64xf32>
    %336 = math.tanh %335 : vector<2x64xf32>
    %337 = arith.mulf %332, %336 : vector<2x64xf32>
    %c14_140 = arith.constant 14 : index
    %c0_141 = arith.constant 0 : index
    %338 = vector.load %arg13[%c14_140, %c0_141] : memref<16x128xf32, #tpu.memory_space<vmem>>, vector<2x64xf32>
    tpu.vector_store %arg13[%c14_140, %c0_141], %337 {strides = array<i32>} : memref<16x128xf32, #tpu.memory_space<vmem>>, vector<2x64xf32>,
    %c0_142 = arith.constant 0 : index
    %c64_143 = arith.constant 64 : index
    %339 = vector.load %arg13[%c0_142, %c64_143] : memref<16x128xf32, #tpu.memory_space<vmem>>, vector<2x64xf32>
    tpu.vector_store %arg13[%c0_142, %c64_143], %337 {strides = array<i32>} : memref<16x128xf32, #tpu.memory_space<vmem>>, vector<2x64xf32>,
    %c0_144 = arith.constant 0 : index
    %c0_145 = arith.constant 0 : index
    %340 = vector.load %arg13[%c0_144, %c0_145] : memref<16x128xf32, #tpu.memory_space<vmem>>, vector<16x128xf32>
    %c0_146 = arith.constant 0 : index
    %c0_147 = arith.constant 0 : index
    %341 = vector.load %arg7[%c0_146, %c0_147] : memref<128x64xf32, #tpu.memory_space<vmem>>, vector<128x64xf32>
    %cst_148 = arith.constant dense<0.000000e+00> : vector<16x64xf32>
    %342 = tpu.matmul %340, %341, %cst_148 {dimension_numbers = #tpu.dot_dimension_numbers<[1], [0], [0], [1], [0, 0, 1, 1], [], []>} : vector<16x128xf32>, vector<128x64xf32>, vector<16x64xf32> -> vector<16x64xf32>
    %c0_149 = arith.constant 0 : index
    %c0_150 = arith.constant 0 : index
    %343 = vector.load %arg8[%c0_149, %c0_150] : memref<1x64xf32, #tpu.memory_space<vmem>>, vector<1x64xf32>
    %344 = vector.broadcast %343 : vector<1x64xf32> to vector<16x64xf32>
    %345 = arith.addf %342, %344 : vector<16x64xf32>
    %cst_151 = arith.constant 0.000000e+00 : f32
    %346 = vector.broadcast %cst_151 : f32 to vector<16x64xf32>
    %347 = arith.maximumf %345, %346 : vector<16x64xf32>
    %c0_152 = arith.constant 0 : index
    %c0_153 = arith.constant 0 : index
    %348 = vector.load %arg9[%c0_152, %c0_153] : memref<1x64xf32, #tpu.memory_space<vmem>>, vector<1x64xf32>
    %349 = vector.broadcast %348 : vector<1x64xf32> to vector<16x64xf32>
    %350 = arith.mulf %347, %349 : vector<16x64xf32>
    %cst_154 = arith.constant dense<0.000000e+00> : vector<16xf32>
    %351 = vector.multi_reduction <add>, %350, %cst_154 [1] : vector<16x64xf32> to vector<16xf32>
    %352 = vector.shape_cast %351 : vector<16xf32> to vector<16x1xf32>
    %c0_155 = arith.constant 0 : index
    %c0_156 = arith.constant 0 : index
    %353 = vector.load %arg10[%c0_155, %c0_156] : memref<1x1xf32, #tpu.memory_space<vmem>>, vector<1x1xf32>
    %354 = vector.broadcast %353 : vector<1x1xf32> to vector<16x1xf32>
    %355 = arith.addf %352, %354 : vector<16x1xf32>
    %356 = arith.negf %355 : vector<16x1xf32>
    %357 = math.exp %356 : vector<16x1xf32>
    %cst_157 = arith.constant 1.000000e+00 : f32
    %358 = vector.broadcast %cst_157 : f32 to vector<16x1xf32>
    %359 = arith.addf %358, %357 : vector<16x1xf32>
    %360 = arith.divf %358, %359 : vector<16x1xf32>
    %c0_158 = arith.constant 0 : index
    %c0_159 = arith.constant 0 : index
    %361 = vector.load %arg11[%c0_158, %c0_159] : memref<16x1xf32, #tpu.memory_space<vmem>>, vector<16x1xf32>
    tpu.vector_store %arg11[%c0_158, %c0_159], %360 {strides = array<i32>} : memref<16x1xf32, #tpu.memory_space<vmem>>, vector<16x1xf32>,
    return
  }
}

</mosaic_0001>

<llo_original>
// kernel: bidirectional_lstm_forward.1
$region0: #{bidirectional_lstm_forward.1}
  #allocation0 [shape = 'u32[]', space=smem, size = 0x4, offset = 0x4, fixed_abs, tag = 'smem constant byte address 0x4 - core index']
  #allocation1 [shape = 'u32[144,128]{1,0:T(1,128)}', space=vmem, size = 0x12000, scoped, tag = 'internal scratch']
  #allocation2 [shape = 'f32[16,256]{1,0:T(8,128)}', space=vmem, size = 0x4000, scoped, tag = 'scratch operand']
  #allocation3 [shape = 'f32[16,128]{1,0:T(8,128)}', space=vmem, size = 0x2000, scoped, tag = 'scratch operand']
  #allocation4 [shape = 'f32[1,1]{1,0:T(1,128)S(1)}', space=vmem, size = 0x200, scoped, tag = 'scoped memory for bidirectional_lstm_forward.1']
  %s0 = inlined_call_operand.vmem [shape: f32[16,32], index: 0, kind: input, shape index: {}]
  %s1 = inlined_call_operand.vmem [shape: f32[32,256], index: 1, kind: input, shape index: {}]
  %s2 = inlined_call_operand.vmem [shape: f32[64,256], index: 2, kind: input, shape index: {}]
  %s3 = inlined_call_operand.vmem [shape: f32[1,256], index: 3, kind: input, shape index: {}]
  %s4 = inlined_call_operand.vmem [shape: f32[128,256], index: 4, kind: input, shape index: {}]
  %s5 = inlined_call_operand.vmem [shape: f32[64,256], index: 5, kind: input, shape index: {}]
  %s6 = inlined_call_operand.vmem [shape: f32[1,256], index: 6, kind: input, shape index: {}]
  %s7 = inlined_call_operand.vmem [shape: f32[128,64], index: 7, kind: input, shape index: {}]
  %s8 = inlined_call_operand.vmem [shape: f32[1,64], index: 8, kind: input, shape index: {}]
  %s9 = inlined_call_operand.vmem [shape: f32[1,64], index: 9, kind: input, shape index: {}]
  %s10 = inlined_call_operand.<no memory space> [shape: f32[1,1], index: 10, kind: input, shape index: {}]
  %s11 = inlined_call_operand.vmem [shape: f32[16,1], index: 11, kind: output, shape index: {}]
  %s12 = sld [smem:[#allocation0]]
  $region54: #{bidirectional_lstm_forward.1} parent=0
    _
  %s14 = ssub.s32 1, %s12
  %s15 = scalar_select 0, %s14, %s12
  %v16 = vstv %s10
  %17 = vst [vmem:[#allocation4] sm:$0x1] %v16
  // Predicated region
  $region2: #{bidirectional_lstm_forward.1} parent=0 // pred_check
    _
  $region3: #{bidirectional_lstm_forward.1} parent=0 // pred_check_branch
    %19 = sbr.rel (0) target = $region5
  $region4: #{bidirectional_lstm_forward.1} parent=0 // pred_region
    _
  $region5: #{bidirectional_lstm_forward.1} parent=0 // pred_fallthru
    _
  // Predicated region
  $region6: #{bidirectional_lstm_forward.1} parent=0 // pred_check
    _
  $region7: #{bidirectional_lstm_forward.1} parent=0 // pred_check_branch
    %21 = sbr.rel (0) target = $region9
  $region8: #{bidirectional_lstm_forward.1} parent=0 // pred_region
    _
  $region9: #{bidirectional_lstm_forward.1} parent=0 // pred_fallthru
    _
  // Predicated region
  $region10: #{bidirectional_lstm_forward.1} parent=0 // pred_check
    _
  $region11: #{bidirectional_lstm_forward.1} parent=0 // pred_check_branch
    %23 = sbr.rel (0) target = $region13
  $region12: #{bidirectional_lstm_forward.1} parent=0 // pred_region
    _
  $region13: #{bidirectional_lstm_forward.1} parent=0 // pred_fallthru
    _
  // Predicated region
  $region14: #{bidirectional_lstm_forward.1} parent=0 // pred_check
    _
  $region15: #{bidirectional_lstm_forward.1} parent=0 // pred_check_branch
    %25 = sbr.rel (0) target = $region17
  $region16: #{bidirectional_lstm_forward.1} parent=0 // pred_region
    _
  $region17: #{bidirectional_lstm_forward.1} parent=0 // pred_fallthru
    _
  // Predicated region
  $region18: #{bidirectional_lstm_forward.1} parent=0 // pred_check
    _
  $region19: #{bidirectional_lstm_forward.1} parent=0 // pred_check_branch
    %27 = sbr.rel (0) target = $region21
  $region20: #{bidirectional_lstm_forward.1} parent=0 // pred_region
    _
  $region21: #{bidirectional_lstm_forward.1} parent=0 // pred_fallthru
    _
  // Predicated region
  $region22: #{bidirectional_lstm_forward.1} parent=0 // pred_check
    _
  $region23: #{bidirectional_lstm_forward.1} parent=0 // pred_check_branch
    %29 = sbr.rel (0) target = $region25
  $region24: #{bidirectional_lstm_forward.1} parent=0 // pred_region
    _
  $region25: #{bidirectional_lstm_forward.1} parent=0 // pred_fallthru
    _
  // Predicated region
  $region26: #{bidirectional_lstm_forward.1} parent=0 // pred_check
    _
  $region27: #{bidirectional_lstm_forward.1} parent=0 // pred_check_branch
    %31 = sbr.rel (0) target = $region29
  $region28: #{bidirectional_lstm_forward.1} parent=0 // pred_region
    _
  $region29: #{bidirectional_lstm_forward.1} parent=0 // pred_fallthru
    _
  // Predicated region
  $region30: #{bidirectional_lstm_forward.1} parent=0 // pred_check
    _
  $region31: #{bidirectional_lstm_forward.1} parent=0 // pred_check_branch
    %33 = sbr.rel (0) target = $region33
  $region32: #{bidirectional_lstm_forward.1} parent=0 // pred_region
    _
  $region33: #{bidirectional_lstm_forward.1} parent=0 // pred_fallthru
    _
  // Predicated region
  $region34: #{bidirectional_lstm_forward.1} parent=0 // pred_check
    _
  $region35: #{bidirectional_lstm_forward.1} parent=0 // pred_check_branch
    %35 = sbr.rel (0) target = $region37
  $region36: #{bidirectional_lstm_forward.1} parent=0 // pred_region
    _
  $region37: #{bidirectional_lstm_forward.1} parent=0 // pred_fallthru
    _
  // Predicated region
  $region38: #{bidirectional_lstm_forward.1} parent=0 // pred_check
    _
  $region39: #{bidirectional_lstm_forward.1} parent=0 // pred_check_branch
    %37 = sbr.rel (0) target = $region41
  $region40: #{bidirectional_lstm_forward.1} parent=0 // pred_region
    _
  $region41: #{bidirectional_lstm_forward.1} parent=0 // pred_fallthru
    _
  // Predicated region
  $region42: #{bidirectional_lstm_forward.1} parent=0 // pred_check
    _
  $region43: #{bidirectional_lstm_forward.1} parent=0 // pred_check_branch
    %39 = sbr.rel (0) target = $region45
  $region44: #{bidirectional_lstm_forward.1} parent=0 // pred_region
    _
  $region45: #{bidirectional_lstm_forward.1} parent=0 // pred_fallthru
    _
  %v40 = vld [vmem:[%s0] sm:$0xff]
  %v41 = vld [vmem:[%s0 + $0x8] sm:$0xff]
  %v42 = vld [vmem:[%s1] sm:$0xff]
  %v43 = vld [vmem:[%s1 + $0x8] sm:$0xff]
  %v44 = vld [vmem:[%s1 + $0x10] sm:$0xff]
  %v45 = vld [vmem:[%s1 + $0x18] sm:$0xff]
  %v46 = vld [vmem:[%s1 + $0x20] sm:$0xff]
  %v47 = vld [vmem:[%s1 + $0x28] sm:$0xff]
  %v48 = vld [vmem:[%s1 + $0x30] sm:$0xff]
  %v49 = vld [vmem:[%s1 + $0x38] sm:$0xff]
  %v50 = vld [vmem:[%s2] sm:$0xff]
  %v51 = vld [vmem:[%s2 + $0x8] sm:$0xff]
  %v52 = vld [vmem:[%s2 + $0x10] sm:$0xff]
  %v53 = vld [vmem:[%s2 + $0x18] sm:$0xff]
  %v54 = vld [vmem:[%s2 + $0x20] sm:$0xff]
  %v55 = vld [vmem:[%s2 + $0x28] sm:$0xff]
  %v56 = vld [vmem:[%s2 + $0x30] sm:$0xff]
  %v57 = vld [vmem:[%s2 + $0x38] sm:$0xff]
  %v58 = vld [vmem:[%s2 + $0x40] sm:$0xff]
  %v59 = vld [vmem:[%s2 + $0x48] sm:$0xff]
  %v60 = vld [vmem:[%s2 + $0x50] sm:$0xff]
  %v61 = vld [vmem:[%s2 + $0x58] sm:$0xff]
  %v62 = vld [vmem:[%s2 + $0x60] sm:$0xff]
  %v63 = vld [vmem:[%s2 + $0x68] sm:$0xff]
  %v64 = vld [vmem:[%s2 + $0x70] sm:$0xff]
  %v65 = vld [vmem:[%s2 + $0x78] sm:$0xff]
  %v66 = vld [vmem:[%s3] sm:$0x3]
  %v68 = vlaneseq
  %v69 = vshrl.u32 %v68, 7
  %v70 = vsub.s32 0, %v69
  %v71 = vrot.slane %v66, %v70
  %v72 = vlaneseq
  %v73 = vshrl.u32 %v72, 7
  %v74 = vsub.s32 1, %v73
  %v75 = vrot.slane %v66, %v74
  %vm78 = vcmask 261120
  %v80 = vsel %vm78, %v40, 0
  %v83 = vsel %vm78, %v41, 0
  %85 = vmatprep.subr.mxu0 0.0
  %86 = vmatpush1.msra.mxu0 0.0
  %87 = vmatprep.subr.mxu0 0.0
  %88 = vmatpush1.msra.mxu0 0.0
  %89 = vmatprep.subr.mxu0 0.0
  %90 = vmatpush1.msra.mxu0 0.0
  %91 = vmatprep.subr.mxu0 0.0
  %92 = vmatpush1.msra.mxu0 0.0
  %93 = vmatprep.subr.mxu0 0.0
  %94 = vmatpush1.msra.mxu0 0.0
  %95 = vmatprep.subr.mxu0 0.0
  %96 = vmatpush1.msra.mxu0 0.0
  %97 = vmatprep.subr.mxu0 0.0
  %98 = vmatpush1.msra.mxu0 0.0
  %99 = vmatprep.subr.mxu0 0.0
  %100 = vmatpush1.msra.mxu0 0.0
  %101 = vmatprep.subr.mxu0 0.0
  %102 = vmatpush1.msra.mxu0 0.0
  %103 = vmatprep.subr.mxu0 0.0
  %104 = vmatpush1.msra.mxu0 0.0
  %105 = vmatprep.subr.mxu0 0.0
  %106 = vmatpush1.msra.mxu0 0.0
  %107 = vmatprep.subr.mxu0 0.0
  %108 = vmatpush1.msra.mxu0 0.0
  %109 = vmatprep.subr.mxu0 %v49
  %110 = vmatpush1.msra.mxu0 %v48
  %111 = vmatprep.subr.mxu0 %v47
  %112 = vmatpush1.msra.mxu0 %v46
  %113 = vmatprep.subr.mxu0 %v45
  %114 = vmatpush1.msra.mxu0 %v44
  %115 = vmatprep.subr.mxu0 %v43
  %116 = vmatpush1.msra.mxu0 %v42
  %117 = vmatprep.subr.mxu0 0.0
  %118 = vmatpush2.msra.mxu0 0.0
  %119 = vmatprep.subr.mxu0 0.0
  %120 = vmatpush2.msra.mxu0 0.0
  %121 = vmatprep.subr.mxu0 0.0
  %122 = vmatpush2.msra.mxu0 0.0
  %123 = vmatprep.subr.mxu0 0.0
  %124 = vmatpush2.msra.mxu0 0.0
  %125 = vmatprep.subr.mxu0 0.0
  %126 = vmatpush2.msra.mxu0 0.0
  %127 = vmatprep.subr.mxu0 0.0
  %128 = vmatpush2.msra.mxu0 0.0
  %129 = vmatprep.subr.mxu0 0.0
  %130 = vmatpush2.msra.mxu0 0.0
  %131 = vmatprep.subr.mxu0 0.0
  %132 = vmatpush2.msra.mxu0 0.0
  %133 = vmatprep.subr.mxu0 0.0
  %134 = vmatpush2.msra.mxu0 0.0
  %135 = vmatprep.subr.mxu0 0.0
  %136 = vmatpush2.msra.mxu0 0.0
  %137 = vmatprep.subr.mxu0 0.0
  %138 = vmatpush2.msra.mxu0 0.0
  %139 = vmatprep.subr.mxu0 0.0
  %140 = vmatpush2.msra.mxu0 0.0
  %141 = vmatprep.subr.mxu0 0.0
  %142 = vmatpush2.msra.mxu0 0.0
  %143 = vmatprep.subr.mxu0 0.0
  %144 = vmatpush2.msra.mxu0 0.0
  %145 = vmatprep.subr.mxu0 0.0
  %146 = vmatpush2.msra.mxu0 0.0
  %147 = vmatprep.subr.mxu0 0.0
  %148 = vmatpush2.msra.mxu0 0.0
  %149 = vmatprep.mubr.f32.mxu0 0.0
  %150 = vmatmul.mubr.f32.gmra.mxu0 %v80
  %v151 = vpop.f32.mrf.mxu0
  %v152 = vadd.f32 %v71, %v151
  %v153 = vpop.f32.mrf.mxu0
  %v154 = vadd.f32 %v75, %v153
  %155 = vmatprep.mubr.f32.mxu0 0.0
  %156 = vmatmul.mubr.f32.gmra.mxu0 %v83
  %v157 = vpop.f32.mrf.mxu0
  %v158 = vadd.f32 %v71, %v157
  %v159 = vpop.f32.mrf.mxu0
  %v160 = vadd.f32 %v75, %v159
  %161 = vdwg.mxu0
  %162 = vst [vmem:[#allocation2] sm:$0xff] %v152
  %163 = vst [vmem:[#allocation2 + $0x8] sm:$0xff] %v154
  %164 = vst [vmem:[#allocation2 + $0x10] sm:$0xff] %v158
  %165 = vst [vmem:[#allocation2 + $0x18] sm:$0xff] %v160
  %v166 = vld [vmem:[#allocation2] sm:$0x3]
  %v167 = vld [vmem:[#allocation2 + $0x8] sm:$0x3]
  %vm168 = vcmask 523264
  %v170 = vsel %vm168, 0.0, 0
  %172 = vmatprep.subr.mxu0 0.0
  %173 = vmatpush1.msra.mxu0 0.0
  %174 = vmatprep.subr.mxu0 0.0
  %175 = vmatpush1.msra.mxu0 0.0
  %176 = vmatprep.subr.mxu0 0.0
  %177 = vmatpush1.msra.mxu0 0.0
  %178 = vmatprep.subr.mxu0 0.0
  %179 = vmatpush1.msra.mxu0 0.0
  %180 = vmatprep.subr.mxu0 0.0
  %181 = vmatpush1.msra.mxu0 0.0
  %182 = vmatprep.subr.mxu0 0.0
  %183 = vmatpush1.msra.mxu0 0.0
  %184 = vmatprep.subr.mxu0 0.0
  %185 = vmatpush1.msra.mxu0 0.0
  %186 = vmatprep.subr.mxu0 0.0
  %187 = vmatpush1.msra.mxu0 0.0
  %188 = vmatprep.subr.mxu0 %v65
  %189 = vmatpush1.msra.mxu0 %v64
  %190 = vmatprep.subr.mxu0 %v63
  %191 = vmatpush1.msra.mxu0 %v62
  %192 = vmatprep.subr.mxu0 %v61
  %193 = vmatpush1.msra.mxu0 %v60
  %194 = vmatprep.subr.mxu0 %v59
  %195 = vmatpush1.msra.mxu0 %v58
  %196 = vmatprep.subr.mxu0 %v57
  %197 = vmatpush1.msra.mxu0 %v56
  %198 = vmatprep.subr.mxu0 %v55
  %199 = vmatpush1.msra.mxu0 %v54
  %200 = vmatprep.subr.mxu0 %v53
  %201 = vmatpush1.msra.mxu0 %v52
  %202 = vmatprep.subr.mxu0 %v51
  %203 = vmatpush1.msra.mxu0 %v50
  %204 = vmatprep.subr.mxu0 0.0
  %205 = vmatpush2.msra.mxu0 0.0
  %206 = vmatprep.subr.mxu0 0.0
  %207 = vmatpush2.msra.mxu0 0.0
  %208 = vmatprep.subr.mxu0 0.0
  %209 = vmatpush2.msra.mxu0 0.0
  %210 = vmatprep.subr.mxu0 0.0
  %211 = vmatpush2.msra.mxu0 0.0
  %212 = vmatprep.subr.mxu0 0.0
  %213 = vmatpush2.msra.mxu0 0.0
  %214 = vmatprep.subr.mxu0 0.0
  %215 = vmatpush2.msra.mxu0 0.0
  %216 = vmatprep.subr.mxu0 0.0
  %217 = vmatpush2.msra.mxu0 0.0
  %218 = vmatprep.subr.mxu0 0.0
  %219 = vmatpush2.msra.mxu0 0.0
  %220 = vmatprep.subr.mxu0 0.0
  %221 = vmatpush2.msra.mxu0 0.0
  %222 = vmatprep.subr.mxu0 0.0
  %223 = vmatpush2.msra.mxu0 0.0
  %224 = vmatprep.subr.mxu0 0.0
  %225 = vmatpush2.msra.mxu0 0.0
  %226 = vmatprep.subr.mxu0 0.0
  %227 = vmatpush2.msra.mxu0 0.0
  %228 = vmatprep.subr.mxu0 0.0
  %229 = vmatpush2.msra.mxu0 0.0
  %230 = vmatprep.subr.mxu0 0.0
  %231 = vmatpush2.msra.mxu0 0.0
  %232 = vmatprep.subr.mxu0 0.0
  %233 = vmatpush2.msra.mxu0 0.0
  %234 = vmatprep.subr.mxu0 0.0
  %235 = vmatpush2.msra.mxu0 0.0
  %236 = vmatprep.mubr.f32.mxu0 0.0
  %237 = vmatmul.mubr.f32.gmra.mxu0 %v170
  %v238 = vpop.f32.mrf.mxu0
  %v239 = vadd.f32 0.0, %v238
  %v240 = vpop.f32.mrf.mxu0
  %v241 = vadd.f32 0.0, %v240
  %242 = vdwg.mxu0
  %v243 = vadd.f32 %v166, %v239
  %v244 = vadd.f32 %v167, %v241
  %v245 = vxor.u32 %v243, 2147483648
  %v246 = vxor.u32 %v244, 2147483648
  %v247 = vmul.f32 %v245, 1.442695
  %v248 = vpow.pop %v247
  %v249 = vmul.f32 %v246, 1.442695
  %v250 = vpow.pop %v249
  %v251 = vadd.f32 %v248, 1.0
  %v252 = vadd.f32 %v250, 1.0
  %v253 = vrcp.pop %v251
  %v254 = vmul.f32 1.0, %v253
  %v255 = vrcp.pop %v252
  %v256 = vmul.f32 1.0, %v255
  %v257 = vtanh.pop %v244
  %v258 = vmul.f32 %v254, 0.0
  %v259 = vmul.f32 %v254, %v257
  %261 = vrot.lane.b32.xlu0 %v259, 64
  %v262 = vpop.permute.xlu0 %261
  %v264 = vadd.f32 %v258, %v262
  %v265 = vtanh.pop %v264
  %v266 = vmul.f32 %v256, %v265
  %268 = vrot.lane.b32.xlu0 %v266, 64
  %v269 = vpop.permute.xlu0 %268
  %vm271 = vcmask 517120
  %272 = vst.msk [vmem:[#allocation3] sm:$0x3] %vm271, %v269
  %vm273 = vcmask 1041920
  %274 = vst.msk [vmem:[#allocation3 + $0xe] sm:$0x3] %vm273, %v266
  %v275 = vld [vmem:[#allocation2] sm:$0xc]
  %v276 = vld [vmem:[#allocation2 + $0x8] sm:$0xc]
  %v277 = vsel %vm168, %v269, 0
  %279 = vmatprep.subr.mxu0 0.0
  %280 = vmatpush1.msra.mxu0 0.0
  %281 = vmatprep.subr.mxu0 0.0
  %282 = vmatpush1.msra.mxu0 0.0
  %283 = vmatprep.subr.mxu0 0.0
  %284 = vmatpush1.msra.mxu0 0.0
  %285 = vmatprep.subr.mxu0 0.0
  %286 = vmatpush1.msra.mxu0 0.0
  %287 = vmatprep.subr.mxu0 0.0
  %288 = vmatpush1.msra.mxu0 0.0
  %289 = vmatprep.subr.mxu0 0.0
  %290 = vmatpush1.msra.mxu0 0.0
  %291 = vmatprep.subr.mxu0 0.0
  %292 = vmatpush1.msra.mxu0 0.0
  %293 = vmatprep.subr.mxu0 0.0
  %294 = vmatpush1.msra.mxu0 0.0
  %295 = vmatprep.subr.mxu0 %v65
  %296 = vmatpush1.msra.mxu0 %v64
  %297 = vmatprep.subr.mxu0 %v63
  %298 = vmatpush1.msra.mxu0 %v62
  %299 = vmatprep.subr.mxu0 %v61
  %300 = vmatpush1.msra.mxu0 %v60
  %301 = vmatprep.subr.mxu0 %v59
  %302 = vmatpush1.msra.mxu0 %v58
  %303 = vmatprep.subr.mxu0 %v57
  %304 = vmatpush1.msra.mxu0 %v56
  %305 = vmatprep.subr.mxu0 %v55
  %306 = vmatpush1.msra.mxu0 %v54
  %307 = vmatprep.subr.mxu0 %v53
  %308 = vmatpush1.msra.mxu0 %v52
  %309 = vmatprep.subr.mxu0 %v51
  %310 = vmatpush1.msra.mxu0 %v50
  %311 = vmatprep.subr.mxu0 0.0
  %312 = vmatpush2.msra.mxu0 0.0
  %313 = vmatprep.subr.mxu0 0.0
  %314 = vmatpush2.msra.mxu0 0.0
  %315 = vmatprep.subr.mxu0 0.0
  %316 = vmatpush2.msra.mxu0 0.0
  %317 = vmatprep.subr.mxu0 0.0
  %318 = vmatpush2.msra.mxu0 0.0
  %319 = vmatprep.subr.mxu0 0.0
  %320 = vmatpush2.msra.mxu0 0.0
  %321 = vmatprep.subr.mxu0 0.0
  %322 = vmatpush2.msra.mxu0 0.0
  %323 = vmatprep.subr.mxu0 0.0
  %324 = vmatpush2.msra.mxu0 0.0
  %325 = vmatprep.subr.mxu0 0.0
  %326 = vmatpush2.msra.mxu0 0.0
  %327 = vmatprep.subr.mxu0 0.0
  %328 = vmatpush2.msra.mxu0 0.0
  %329 = vmatprep.subr.mxu0 0.0
  %330 = vmatpush2.msra.mxu0 0.0
  %331 = vmatprep.subr.mxu0 0.0
  %332 = vmatpush2.msra.mxu0 0.0
  %333 = vmatprep.subr.mxu0 0.0
  %334 = vmatpush2.msra.mxu0 0.0
  %335 = vmatprep.subr.mxu0 0.0
  %336 = vmatpush2.msra.mxu0 0.0
  %337 = vmatprep.subr.mxu0 0.0
  %338 = vmatpush2.msra.mxu0 0.0
  %339 = vmatprep.subr.mxu0 0.0
  %340 = vmatpush2.msra.mxu0 0.0
  %341 = vmatprep.subr.mxu0 0.0
  %342 = vmatpush2.msra.mxu0 0.0
  %343 = vmatprep.mubr.f32.mxu0 0.0
  %344 = vmatmul.mubr.f32.gmra.mxu0 %v277
  %v345 = vpop.f32.mrf.mxu0
  %v346 = vadd.f32 0.0, %v345
  %v347 = vpop.f32.mrf.mxu0
  %v348 = vadd.f32 0.0, %v347
  %349 = vdwg.mxu0
  %v352 = vrot.slane %v346, 6
  %v353 = vrot.slane %v348, 6
  %v356 = vadd.f32 %v275, %v352
  %v357 = vadd.f32 %v276, %v353
  %v358 = vxor.u32 %v356, 2147483648
  %v359 = vxor.u32 %v357, 2147483648
  %v360 = vmul.f32 %v358, 1.442695
  %v361 = vpow.pop %v360
  %v362 = vmul.f32 %v359, 1.442695
  %v363 = vpow.pop %v362
  %v364 = vadd.f32 %v361, 1.0
  %v365 = vadd.f32 %v363, 1.0
  %v366 = vrcp.pop %v364
  %v367 = vmul.f32 1.0, %v366
  %v368 = vrcp.pop %v365
  %v369 = vmul.f32 1.0, %v368
  %v370 = vtanh.pop %v357
  %v372 = vrot.slane %v264, 6
  %v374 = vmul.f32 %v367, %v372
  %v375 = vmul.f32 %v367, %v370
  %377 = vrot.lane.b32.xlu0 %v375, 64
  %v378 = vpop.permute.xlu0 %377
  %v380 = vadd.f32 %v374, %v378
  %v381 = vtanh.pop %v380
  %v382 = vmul.f32 %v369, %v381
  %384 = vrot.lane.b32.xlu0 %v382, 64
  %v385 = vpop.permute.xlu0 %384
  %vm387 = vcmask 519170
  %388 = vst.msk [vmem:[#allocation3] sm:$0xc] %vm387, %v385
  %vm389 = vcmask 1043970
  %390 = vst.msk [vmem:[#allocation3 + $0xa] sm:$0xc] %vm389, %v382
  %v391 = vld [vmem:[#allocation2] sm:$0x30]
  %v392 = vld [vmem:[#allocation2 + $0x8] sm:$0x30]
  %v393 = vrot.slane %v382, 2
  %394 = vrot.lane.b32.xlu0 %v393, 64
  %v395 = vpop.permute.xlu0 %394
  %v396 = vsel %vm168, %v395, 0
  %398 = vmatprep.subr.mxu0 0.0
  %399 = vmatpush1.msra.mxu0 0.0
  %400 = vmatprep.subr.mxu0 0.0
  %401 = vmatpush1.msra.mxu0 0.0
  %402 = vmatprep.subr.mxu0 0.0
  %403 = vmatpush1.msra.mxu0 0.0
  %404 = vmatprep.subr.mxu0 0.0
  %405 = vmatpush1.msra.mxu0 0.0
  %406 = vmatprep.subr.mxu0 0.0
  %407 = vmatpush1.msra.mxu0 0.0
  %408 = vmatprep.subr.mxu0 0.0
  %409 = vmatpush1.msra.mxu0 0.0
  %410 = vmatprep.subr.mxu0 0.0
  %411 = vmatpush1.msra.mxu0 0.0
  %412 = vmatprep.subr.mxu0 0.0
  %413 = vmatpush1.msra.mxu0 0.0
  %414 = vmatprep.subr.mxu0 %v65
  %415 = vmatpush1.msra.mxu0 %v64
  %416 = vmatprep.subr.mxu0 %v63
  %417 = vmatpush1.msra.mxu0 %v62
  %418 = vmatprep.subr.mxu0 %v61
  %419 = vmatpush1.msra.mxu0 %v60
  %420 = vmatprep.subr.mxu0 %v59
  %421 = vmatpush1.msra.mxu0 %v58
  %422 = vmatprep.subr.mxu0 %v57
  %423 = vmatpush1.msra.mxu0 %v56
  %424 = vmatprep.subr.mxu0 %v55
  %425 = vmatpush1.msra.mxu0 %v54
  %426 = vmatprep.subr.mxu0 %v53
  %427 = vmatpush1.msra.mxu0 %v52
  %428 = vmatprep.subr.mxu0 %v51
  %429 = vmatpush1.msra.mxu0 %v50
  %430 = vmatprep.subr.mxu0 0.0
  %431 = vmatpush2.msra.mxu0 0.0
  %432 = vmatprep.subr.mxu0 0.0
  %433 = vmatpush2.msra.mxu0 0.0
  %434 = vmatprep.subr.mxu0 0.0
  %435 = vmatpush2.msra.mxu0 0.0
  %436 = vmatprep.subr.mxu0 0.0
  %437 = vmatpush2.msra.mxu0 0.0
  %438 = vmatprep.subr.mxu0 0.0
  %439 = vmatpush2.msra.mxu0 0.0
  %440 = vmatprep.subr.mxu0 0.0
  %441 = vmatpush2.msra.mxu0 0.0
  %442 = vmatprep.subr.mxu0 0.0
  %443 = vmatpush2.msra.mxu0 0.0
  %444 = vmatprep.subr.mxu0 0.0
  %445 = vmatpush2.msra.mxu0 0.0
  %446 = vmatprep.subr.mxu0 0.0
  %447 = vmatpush2.msra.mxu0 0.0
  %448 = vmatprep.subr.mxu0 0.0
  %449 = vmatpush2.msra.mxu0 0.0
  %450 = vmatprep.subr.mxu0 0.0
  %451 = vmatpush2.msra.mxu0 0.0
  %452 = vmatprep.subr.mxu0 0.0
  %453 = vmatpush2.msra.mxu0 0.0
  %454 = vmatprep.subr.mxu0 0.0
  %455 = vmatpush2.msra.mxu0 0.0
  %456 = vmatprep.subr.mxu0 0.0
  %457 = vmatpush2.msra.mxu0 0.0
  %458 = vmatprep.subr.mxu0 0.0
  %459 = vmatpush2.msra.mxu0 0.0
  %460 = vmatprep.subr.mxu0 0.0
  %461 = vmatpush2.msra.mxu0 0.0
  %462 = vmatprep.mubr.f32.mxu0 0.0
  %463 = vmatmul.mubr.f32.gmra.mxu0 %v396
  %v464 = vpop.f32.mrf.mxu0
  %v465 = vadd.f32 0.0, %v464
  %v466 = vpop.f32.mrf.mxu0
  %v467 = vadd.f32 0.0, %v466
  %468 = vdwg.mxu0
  %v471 = vrot.slane %v465, 4
  %v472 = vrot.slane %v467, 4
  %v475 = vadd.f32 %v391, %v471
  %v476 = vadd.f32 %v392, %v472
  %v477 = vxor.u32 %v475, 2147483648
  %v478 = vxor.u32 %v476, 2147483648
  %v479 = vmul.f32 %v477, 1.442695
  %v480 = vpow.pop %v479
  %v481 = vmul.f32 %v478, 1.442695
  %v482 = vpow.pop %v481
  %v483 = vadd.f32 %v480, 1.0
  %v484 = vadd.f32 %v482, 1.0
  %v485 = vrcp.pop %v483
  %v486 = vmul.f32 1.0, %v485
  %v487 = vrcp.pop %v484
  %v488 = vmul.f32 1.0, %v487
  %v489 = vtanh.pop %v476
  %v491 = vrot.slane %v380, 6
  %v493 = vmul.f32 %v486, %v491
  %v494 = vmul.f32 %v486, %v489
  %496 = vrot.lane.b32.xlu0 %v494, 64
  %v497 = vpop.permute.xlu0 %496
  %v499 = vadd.f32 %v493, %v497
  %v500 = vtanh.pop %v499
  %v501 = vmul.f32 %v488, %v500
  %503 = vrot.lane.b32.xlu0 %v501, 64
  %v504 = vpop.permute.xlu0 %503
  %vm506 = vcmask 521220
  %507 = vst.msk [vmem:[#allocation3] sm:$0x30] %vm506, %v504
  %vm508 = vcmask 1046020
  %509 = vst.msk [vmem:[#allocation3 + $0x6] sm:$0x30] %vm508, %v501
  %v510 = vld [vmem:[#allocation2] sm:$0xc0]
  %v511 = vld [vmem:[#allocation2 + $0x8] sm:$0xc0]
  %v512 = vrot.slane %v501, 4
  %513 = vrot.lane.b32.xlu0 %v512, 64
  %v514 = vpop.permute.xlu0 %513
  %v515 = vsel %vm168, %v514, 0
  %517 = vmatprep.subr.mxu0 0.0
  %518 = vmatpush1.msra.mxu0 0.0
  %519 = vmatprep.subr.mxu0 0.0
  %520 = vmatpush1.msra.mxu0 0.0
  %521 = vmatprep.subr.mxu0 0.0
  %522 = vmatpush1.msra.mxu0 0.0
  %523 = vmatprep.subr.mxu0 0.0
  %524 = vmatpush1.msra.mxu0 0.0
  %525 = vmatprep.subr.mxu0 0.0
  %526 = vmatpush1.msra.mxu0 0.0
  %527 = vmatprep.subr.mxu0 0.0
  %528 = vmatpush1.msra.mxu0 0.0
  %529 = vmatprep.subr.mxu0 0.0
  %530 = vmatpush1.msra.mxu0 0.0
  %531 = vmatprep.subr.mxu0 0.0
  %532 = vmatpush1.msra.mxu0 0.0
  %533 = vmatprep.subr.mxu0 %v65
  %534 = vmatpush1.msra.mxu0 %v64
  %535 = vmatprep.subr.mxu0 %v63
  %536 = vmatpush1.msra.mxu0 %v62
  %537 = vmatprep.subr.mxu0 %v61
  %538 = vmatpush1.msra.mxu0 %v60
  %539 = vmatprep.subr.mxu0 %v59
  %540 = vmatpush1.msra.mxu0 %v58
  %541 = vmatprep.subr.mxu0 %v57
  %542 = vmatpush1.msra.mxu0 %v56
  %543 = vmatprep.subr.mxu0 %v55
  %544 = vmatpush1.msra.mxu0 %v54
  %545 = vmatprep.subr.mxu0 %v53
  %546 = vmatpush1.msra.mxu0 %v52
  %547 = vmatprep.subr.mxu0 %v51
  %548 = vmatpush1.msra.mxu0 %v50
  %549 = vmatprep.subr.mxu0 0.0
  %550 = vmatpush2.msra.mxu0 0.0
  %551 = vmatprep.subr.mxu0 0.0
  %552 = vmatpush2.msra.mxu0 0.0
  %553 = vmatprep.subr.mxu0 0.0
  %554 = vmatpush2.msra.mxu0 0.0
  %555 = vmatprep.subr.mxu0 0.0
  %556 = vmatpush2.msra.mxu0 0.0
  %557 = vmatprep.subr.mxu0 0.0
  %558 = vmatpush2.msra.mxu0 0.0
  %559 = vmatprep.subr.mxu0 0.0
  %560 = vmatpush2.msra.mxu0 0.0
  %561 = vmatprep.subr.mxu0 0.0
  %562 = vmatpush2.msra.mxu0 0.0
  %563 = vmatprep.subr.mxu0 0.0
  %564 = vmatpush2.msra.mxu0 0.0
  %565 = vmatprep.subr.mxu0 0.0
  %566 = vmatpush2.msra.mxu0 0.0
  %567 = vmatprep.subr.mxu0 0.0
  %568 = vmatpush2.msra.mxu0 0.0
  %569 = vmatprep.subr.mxu0 0.0
  %570 = vmatpush2.msra.mxu0 0.0
  %571 = vmatprep.subr.mxu0 0.0
  %572 = vmatpush2.msra.mxu0 0.0
  %573 = vmatprep.subr.mxu0 0.0
  %574 = vmatpush2.msra.mxu0 0.0
  %575 = vmatprep.subr.mxu0 0.0
  %576 = vmatpush2.msra.mxu0 0.0
  %577 = vmatprep.subr.mxu0 0.0
  %578 = vmatpush2.msra.mxu0 0.0
  %579 = vmatprep.subr.mxu0 0.0
  %580 = vmatpush2.msra.mxu0 0.0
  %581 = vmatprep.mubr.f32.mxu0 0.0
  %582 = vmatmul.mubr.f32.gmra.mxu0 %v515
  %v583 = vpop.f32.mrf.mxu0
  %v584 = vadd.f32 0.0, %v583
  %v585 = vpop.f32.mrf.mxu0
  %v586 = vadd.f32 0.0, %v585
  %587 = vdwg.mxu0
  %v590 = vrot.slane %v584, 2
  %v591 = vrot.slane %v586, 2
  %v594 = vadd.f32 %v510, %v590
  %v595 = vadd.f32 %v511, %v591
  %v596 = vxor.u32 %v594, 2147483648
  %v597 = vxor.u32 %v595, 2147483648
  %v598 = vmul.f32 %v596, 1.442695
  %v599 = vpow.pop %v598
  %v600 = vmul.f32 %v597, 1.442695
  %v601 = vpow.pop %v600
  %v602 = vadd.f32 %v599, 1.0
  %v603 = vadd.f32 %v601, 1.0
  %v604 = vrcp.pop %v602
  %v605 = vmul.f32 1.0, %v604
  %v606 = vrcp.pop %v603
  %v607 = vmul.f32 1.0, %v606
  %v608 = vtanh.pop %v595
  %v610 = vrot.slane %v499, 6
  %v612 = vmul.f32 %v605, %v610
  %v613 = vmul.f32 %v605, %v608
  %615 = vrot.lane.b32.xlu0 %v613, 64
  %v616 = vpop.permute.xlu0 %615
  %v618 = vadd.f32 %v612, %v616
  %v619 = vtanh.pop %v618
  %v620 = vmul.f32 %v607, %v619
  %622 = vrot.lane.b32.xlu0 %v620, 64
  %v623 = vpop.permute.xlu0 %622
  %vm625 = vcmask 523270
  %626 = vst.msk [vmem:[#allocation3] sm:$0xc0] %vm625, %v623
  %vm627 = vcmask 1048070
  %628 = vst.msk [vmem:[#allocation3 + $0x2] sm:$0xc0] %vm627, %v620
  %v629 = vld [vmem:[#allocation2 + $0x10] sm:$0x3]
  %v630 = vld [vmem:[#allocation2 + $0x18] sm:$0x3]
  %v631 = vrot.slane %v620, 6
  %632 = vrot.lane.b32.xlu0 %v631, 64
  %v633 = vpop.permute.xlu0 %632
  %v634 = vsel %vm168, %v633, 0
  %636 = vmatprep.subr.mxu0 0.0
  %637 = vmatpush1.msra.mxu0 0.0
  %638 = vmatprep.subr.mxu0 0.0
  %639 = vmatpush1.msra.mxu0 0.0
  %640 = vmatprep.subr.mxu0 0.0
  %641 = vmatpush1.msra.mxu0 0.0
  %642 = vmatprep.subr.mxu0 0.0
  %643 = vmatpush1.msra.mxu0 0.0
  %644 = vmatprep.subr.mxu0 0.0
  %645 = vmatpush1.msra.mxu0 0.0
  %646 = vmatprep.subr.mxu0 0.0
  %647 = vmatpush1.msra.mxu0 0.0
  %648 = vmatprep.subr.mxu0 0.0
  %649 = vmatpush1.msra.mxu0 0.0
  %650 = vmatprep.subr.mxu0 0.0
  %651 = vmatpush1.msra.mxu0 0.0
  %652 = vmatprep.subr.mxu0 %v65
  %653 = vmatpush1.msra.mxu0 %v64
  %654 = vmatprep.subr.mxu0 %v63
  %655 = vmatpush1.msra.mxu0 %v62
  %656 = vmatprep.subr.mxu0 %v61
  %657 = vmatpush1.msra.mxu0 %v60
  %658 = vmatprep.subr.mxu0 %v59
  %659 = vmatpush1.msra.mxu0 %v58
  %660 = vmatprep.subr.mxu0 %v57
  %661 = vmatpush1.msra.mxu0 %v56
  %662 = vmatprep.subr.mxu0 %v55
  %663 = vmatpush1.msra.mxu0 %v54
  %664 = vmatprep.subr.mxu0 %v53
  %665 = vmatpush1.msra.mxu0 %v52
  %666 = vmatprep.subr.mxu0 %v51
  %667 = vmatpush1.msra.mxu0 %v50
  %668 = vmatprep.subr.mxu0 0.0
  %669 = vmatpush2.msra.mxu0 0.0
  %670 = vmatprep.subr.mxu0 0.0
  %671 = vmatpush2.msra.mxu0 0.0
  %672 = vmatprep.subr.mxu0 0.0
  %673 = vmatpush2.msra.mxu0 0.0
  %674 = vmatprep.subr.mxu0 0.0
  %675 = vmatpush2.msra.mxu0 0.0
  %676 = vmatprep.subr.mxu0 0.0
  %677 = vmatpush2.msra.mxu0 0.0
  %678 = vmatprep.subr.mxu0 0.0
  %679 = vmatpush2.msra.mxu0 0.0
  %680 = vmatprep.subr.mxu0 0.0
  %681 = vmatpush2.msra.mxu0 0.0
  %682 = vmatprep.subr.mxu0 0.0
  %683 = vmatpush2.msra.mxu0 0.0
  %684 = vmatprep.subr.mxu0 0.0
  %685 = vmatpush2.msra.mxu0 0.0
  %686 = vmatprep.subr.mxu0 0.0
  %687 = vmatpush2.msra.mxu0 0.0
  %688 = vmatprep.subr.mxu0 0.0
  %689 = vmatpush2.msra.mxu0 0.0
  %690 = vmatprep.subr.mxu0 0.0
  %691 = vmatpush2.msra.mxu0 0.0
  %692 = vmatprep.subr.mxu0 0.0
  %693 = vmatpush2.msra.mxu0 0.0
  %694 = vmatprep.subr.mxu0 0.0
  %695 = vmatpush2.msra.mxu0 0.0
  %696 = vmatprep.subr.mxu0 0.0
  %697 = vmatpush2.msra.mxu0 0.0
  %698 = vmatprep.subr.mxu0 0.0
  %699 = vmatpush2.msra.mxu0 0.0
  %700 = vmatprep.mubr.f32.mxu0 0.0
  %701 = vmatmul.mubr.f32.gmra.mxu0 %v634
  %v702 = vpop.f32.mrf.mxu0
  %v703 = vadd.f32 0.0, %v702
  %v704 = vpop.f32.mrf.mxu0
  %v705 = vadd.f32 0.0, %v704
  %706 = vdwg.mxu0
  %v707 = vadd.f32 %v629, %v703
  %v708 = vadd.f32 %v630, %v705
  %v709 = vxor.u32 %v707, 2147483648
  %v710 = vxor.u32 %v708, 2147483648
  %v711 = vmul.f32 %v709, 1.442695
  %v712 = vpow.pop %v711
  %v713 = vmul.f32 %v710, 1.442695
  %v714 = vpow.pop %v713
  %v715 = vadd.f32 %v712, 1.0
  %v716 = vadd.f32 %v714, 1.0
  %v717 = vrcp.pop %v715
  %v718 = vmul.f32 1.0, %v717
  %v719 = vrcp.pop %v716
  %v720 = vmul.f32 1.0, %v719
  %v721 = vtanh.pop %v708
  %v723 = vrot.slane %v618, 6
  %v725 = vmul.f32 %v718, %v723
  %v726 = vmul.f32 %v718, %v721
  %728 = vrot.lane.b32.xlu0 %v726, 64
  %v729 = vpop.permute.xlu0 %728
  %v731 = vadd.f32 %v725, %v729
  %v732 = vtanh.pop %v731
  %v733 = vmul.f32 %v720, %v732
  %735 = vrot.lane.b32.xlu0 %v733, 64
  %v736 = vpop.permute.xlu0 %735
  %738 = vst.msk [vmem:[#allocation3 + $0x8] sm:$0x3] %vm271, %v736
  %739 = vst.msk [vmem:[#allocation3 + $0x6] sm:$0x3] %vm273, %v733
  %v740 = vld [vmem:[#allocation2 + $0x10] sm:$0xc]
  %v741 = vld [vmem:[#allocation2 + $0x18] sm:$0xc]
  %v742 = vsel %vm168, %v736, 0
  %744 = vmatprep.subr.mxu0 0.0
  %745 = vmatpush1.msra.mxu0 0.0
  %746 = vmatprep.subr.mxu0 0.0
  %747 = vmatpush1.msra.mxu0 0.0
  %748 = vmatprep.subr.mxu0 0.0
  %749 = vmatpush1.msra.mxu0 0.0
  %750 = vmatprep.subr.mxu0 0.0
  %751 = vmatpush1.msra.mxu0 0.0
  %752 = vmatprep.subr.mxu0 0.0
  %753 = vmatpush1.msra.mxu0 0.0
  %754 = vmatprep.subr.mxu0 0.0
  %755 = vmatpush1.msra.mxu0 0.0
  %756 = vmatprep.subr.mxu0 0.0
  %757 = vmatpush1.msra.mxu0 0.0
  %758 = vmatprep.subr.mxu0 0.0
  %759 = vmatpush1.msra.mxu0 0.0
  %760 = vmatprep.subr.mxu0 %v65
  %761 = vmatpush1.msra.mxu0 %v64
  %762 = vmatprep.subr.mxu0 %v63
  %763 = vmatpush1.msra.mxu0 %v62
  %764 = vmatprep.subr.mxu0 %v61
  %765 = vmatpush1.msra.mxu0 %v60
  %766 = vmatprep.subr.mxu0 %v59
  %767 = vmatpush1.msra.mxu0 %v58
  %768 = vmatprep.subr.mxu0 %v57
  %769 = vmatpush1.msra.mxu0 %v56
  %770 = vmatprep.subr.mxu0 %v55
  %771 = vmatpush1.msra.mxu0 %v54
  %772 = vmatprep.subr.mxu0 %v53
  %773 = vmatpush1.msra.mxu0 %v52
  %774 = vmatprep.subr.mxu0 %v51
  %775 = vmatpush1.msra.mxu0 %v50
  %776 = vmatprep.subr.mxu0 0.0
  %777 = vmatpush2.msra.mxu0 0.0
  %778 = vmatprep.subr.mxu0 0.0
  %779 = vmatpush2.msra.mxu0 0.0
  %780 = vmatprep.subr.mxu0 0.0
  %781 = vmatpush2.msra.mxu0 0.0
  %782 = vmatprep.subr.mxu0 0.0
  %783 = vmatpush2.msra.mxu0 0.0
  %784 = vmatprep.subr.mxu0 0.0
  %785 = vmatpush2.msra.mxu0 0.0
  %786 = vmatprep.subr.mxu0 0.0
  %787 = vmatpush2.msra.mxu0 0.0
  %788 = vmatprep.subr.mxu0 0.0
  %789 = vmatpush2.msra.mxu0 0.0
  %790 = vmatprep.subr.mxu0 0.0
  %791 = vmatpush2.msra.mxu0 0.0
  %792 = vmatprep.subr.mxu0 0.0
  %793 = vmatpush2.msra.mxu0 0.0
  %794 = vmatprep.subr.mxu0 0.0
  %795 = vmatpush2.msra.mxu0 0.0
  %796 = vmatprep.subr.mxu0 0.0
  %797 = vmatpush2.msra.mxu0 0.0
  %798 = vmatprep.subr.mxu0 0.0
  %799 = vmatpush2.msra.mxu0 0.0
  %800 = vmatprep.subr.mxu0 0.0
  %801 = vmatpush2.msra.mxu0 0.0
  %802 = vmatprep.subr.mxu0 0.0
  %803 = vmatpush2.msra.mxu0 0.0
  %804 = vmatprep.subr.mxu0 0.0
  %805 = vmatpush2.msra.mxu0 0.0
  %806 = vmatprep.subr.mxu0 0.0
  %807 = vmatpush2.msra.mxu0 0.0
  %808 = vmatprep.mubr.f32.mxu0 0.0
  %809 = vmatmul.mubr.f32.gmra.mxu0 %v742
  %v810 = vpop.f32.mrf.mxu0
  %v811 = vadd.f32 0.0, %v810
  %v812 = vpop.f32.mrf.mxu0
  %v813 = vadd.f32 0.0, %v812
  %814 = vdwg.mxu0
  %v817 = vrot.slane %v811, 6
  %v818 = vrot.slane %v813, 6
  %v821 = vadd.f32 %v740, %v817
  %v822 = vadd.f32 %v741, %v818
  %v823 = vxor.u32 %v821, 2147483648
  %v824 = vxor.u32 %v822, 2147483648
  %v825 = vmul.f32 %v823, 1.442695
  %v826 = vpow.pop %v825
  %v827 = vmul.f32 %v824, 1.442695
  %v828 = vpow.pop %v827
  %v829 = vadd.f32 %v826, 1.0
  %v830 = vadd.f32 %v828, 1.0
  %v831 = vrcp.pop %v829
  %v832 = vmul.f32 1.0, %v831
  %v833 = vrcp.pop %v830
  %v834 = vmul.f32 1.0, %v833
  %v835 = vtanh.pop %v822
  %v837 = vrot.slane %v731, 6
  %v839 = vmul.f32 %v832, %v837
  %v840 = vmul.f32 %v832, %v835
  %842 = vrot.lane.b32.xlu0 %v840, 64
  %v843 = vpop.permute.xlu0 %842
  %v845 = vadd.f32 %v839, %v843
  %v846 = vtanh.pop %v845
  %v847 = vmul.f32 %v834, %v846
  %849 = vrot.lane.b32.xlu0 %v847, 64
  %v850 = vpop.permute.xlu0 %849
  %852 = vst.msk [vmem:[#allocation3 + $0x8] sm:$0xc] %vm387, %v850
  %853 = vst.msk [vmem:[#allocation3 + $0x2] sm:$0xc] %vm389, %v847
  %v854 = vld [vmem:[#allocation2 + $0x10] sm:$0x30]
  %v855 = vld [vmem:[#allocation2 + $0x18] sm:$0x30]
  %v856 = vrot.slane %v847, 2
  %857 = vrot.lane.b32.xlu0 %v856, 64
  %v858 = vpop.permute.xlu0 %857
  %v859 = vsel %vm168, %v858, 0
  %861 = vmatprep.subr.mxu0 0.0
  %862 = vmatpush1.msra.mxu0 0.0
  %863 = vmatprep.subr.mxu0 0.0
  %864 = vmatpush1.msra.mxu0 0.0
  %865 = vmatprep.subr.mxu0 0.0
  %866 = vmatpush1.msra.mxu0 0.0
  %867 = vmatprep.subr.mxu0 0.0
  %868 = vmatpush1.msra.mxu0 0.0
  %869 = vmatprep.subr.mxu0 0.0
  %870 = vmatpush1.msra.mxu0 0.0
  %871 = vmatprep.subr.mxu0 0.0
  %872 = vmatpush1.msra.mxu0 0.0
  %873 = vmatprep.subr.mxu0 0.0
  %874 = vmatpush1.msra.mxu0 0.0
  %875 = vmatprep.subr.mxu0 0.0
  %876 = vmatpush1.msra.mxu0 0.0
  %877 = vmatprep.subr.mxu0 %v65
  %878 = vmatpush1.msra.mxu0 %v64
  %879 = vmatprep.subr.mxu0 %v63
  %880 = vmatpush1.msra.mxu0 %v62
  %881 = vmatprep.subr.mxu0 %v61
  %882 = vmatpush1.msra.mxu0 %v60
  %883 = vmatprep.subr.mxu0 %v59
  %884 = vmatpush1.msra.mxu0 %v58
  %885 = vmatprep.subr.mxu0 %v57
  %886 = vmatpush1.msra.mxu0 %v56
  %887 = vmatprep.subr.mxu0 %v55
  %888 = vmatpush1.msra.mxu0 %v54
  %889 = vmatprep.subr.mxu0 %v53
  %890 = vmatpush1.msra.mxu0 %v52
  %891 = vmatprep.subr.mxu0 %v51
  %892 = vmatpush1.msra.mxu0 %v50
  %893 = vmatprep.subr.mxu0 0.0
  %894 = vmatpush2.msra.mxu0 0.0
  %895 = vmatprep.subr.mxu0 0.0
  %896 = vmatpush2.msra.mxu0 0.0
  %897 = vmatprep.subr.mxu0 0.0
  %898 = vmatpush2.msra.mxu0 0.0
  %899 = vmatprep.subr.mxu0 0.0
  %900 = vmatpush2.msra.mxu0 0.0
  %901 = vmatprep.subr.mxu0 0.0
  %902 = vmatpush2.msra.mxu0 0.0
  %903 = vmatprep.subr.mxu0 0.0
  %904 = vmatpush2.msra.mxu0 0.0
  %905 = vmatprep.subr.mxu0 0.0
  %906 = vmatpush2.msra.mxu0 0.0
  %907 = vmatprep.subr.mxu0 0.0
  %908 = vmatpush2.msra.mxu0 0.0
  %909 = vmatprep.subr.mxu0 0.0
  %910 = vmatpush2.msra.mxu0 0.0
  %911 = vmatprep.subr.mxu0 0.0
  %912 = vmatpush2.msra.mxu0 0.0
  %913 = vmatprep.subr.mxu0 0.0
  %914 = vmatpush2.msra.mxu0 0.0
  %915 = vmatprep.subr.mxu0 0.0
  %916 = vmatpush2.msra.mxu0 0.0
  %917 = vmatprep.subr.mxu0 0.0
  %918 = vmatpush2.msra.mxu0 0.0
  %919 = vmatprep.subr.mxu0 0.0
  %920 = vmatpush2.msra.mxu0 0.0
  %921 = vmatprep.subr.mxu0 0.0
  %922 = vmatpush2.msra.mxu0 0.0
  %923 = vmatprep.subr.mxu0 0.0
  %924 = vmatpush2.msra.mxu0 0.0
  %925 = vmatprep.mubr.f32.mxu0 0.0
  %926 = vmatmul.mubr.f32.gmra.mxu0 %v859
  %v927 = vpop.f32.mrf.mxu0
  %v928 = vadd.f32 0.0, %v927
  %v929 = vpop.f32.mrf.mxu0
  %v930 = vadd.f32 0.0, %v929
  %931 = vdwg.mxu0
  %v934 = vrot.slane %v928, 4
  %v935 = vrot.slane %v930, 4
  %v938 = vadd.f32 %v854, %v934
  %v939 = vadd.f32 %v855, %v935
  %v940 = vxor.u32 %v938, 2147483648
  %v941 = vxor.u32 %v939, 2147483648
  %v942 = vmul.f32 %v940, 1.442695
  %v943 = vpow.pop %v942
  %v944 = vmul.f32 %v941, 1.442695
  %v945 = vpow.pop %v944
  %v946 = vadd.f32 %v943, 1.0
  %v947 = vadd.f32 %v945, 1.0
  %v948 = vrcp.pop %v946
  %v949 = vmul.f32 1.0, %v948
  %v950 = vrcp.pop %v947
  %v951 = vmul.f32 1.0, %v950
  %v952 = vtanh.pop %v939
  %v954 = vrot.slane %v845, 6
  %v956 = vmul.f32 %v949, %v954
  %v957 = vmul.f32 %v949, %v952
  %959 = vrot.lane.b32.xlu0 %v957, 64
  %v960 = vpop.permute.xlu0 %959
  %v962 = vadd.f32 %v956, %v960
  %v963 = vtanh.pop %v962
  %v964 = vmul.f32 %v951, %v963
  %966 = vrot.lane.b32.xlu0 %v964, 64
  %v967 = vpop.permute.xlu0 %966
  %969 = vst.msk [vmem:[#allocation3 + $0x8] sm:$0x30] %vm506, %v967
  %970 = vst.msk [vmem:[#allocation3 - $0x2] sm:$0x30] %vm508, %v964
  %v971 = vld [vmem:[#allocation2 + $0x10] sm:$0xc0]
  %v972 = vld [vmem:[#allocation2 + $0x18] sm:$0xc0]
  %v973 = vrot.slane %v964, 4
  %974 = vrot.lane.b32.xlu0 %v973, 64
  %v975 = vpop.permute.xlu0 %974
  %v976 = vsel %vm168, %v975, 0
  %978 = vmatprep.subr.mxu0 0.0
  %979 = vmatpush1.msra.mxu0 0.0
  %980 = vmatprep.subr.mxu0 0.0
  %981 = vmatpush1.msra.mxu0 0.0
  %982 = vmatprep.subr.mxu0 0.0
  %983 = vmatpush1.msra.mxu0 0.0
  %984 = vmatprep.subr.mxu0 0.0
  %985 = vmatpush1.msra.mxu0 0.0
  %986 = vmatprep.subr.mxu0 0.0
  %987 = vmatpush1.msra.mxu0 0.0
  %988 = vmatprep.subr.mxu0 0.0
  %989 = vmatpush1.msra.mxu0 0.0
  %990 = vmatprep.subr.mxu0 0.0
  %991 = vmatpush1.msra.mxu0 0.0
  %992 = vmatprep.subr.mxu0 0.0
  %993 = vmatpush1.msra.mxu0 0.0
  %994 = vmatprep.subr.mxu0 %v65
  %995 = vmatpush1.msra.mxu0 %v64
  %996 = vmatprep.subr.mxu0 %v63
  %997 = vmatpush1.msra.mxu0 %v62
  %998 = vmatprep.subr.mxu0 %v61
  %999 = vmatpush1.msra.mxu0 %v60
  %1000 = vmatprep.subr.mxu0 %v59
  %1001 = vmatpush1.msra.mxu0 %v58
  %1002 = vmatprep.subr.mxu0 %v57
  %1003 = vmatpush1.msra.mxu0 %v56
  %1004 = vmatprep.subr.mxu0 %v55
  %1005 = vmatpush1.msra.mxu0 %v54
  %1006 = vmatprep.subr.mxu0 %v53
  %1007 = vmatpush1.msra.mxu0 %v52
  %1008 = vmatprep.subr.mxu0 %v51
  %1009 = vmatpush1.msra.mxu0 %v50
  %1010 = vmatprep.subr.mxu0 0.0
  %1011 = vmatpush2.msra.mxu0 0.0
  %1012 = vmatprep.subr.mxu0 0.0
  %1013 = vmatpush2.msra.mxu0 0.0
  %1014 = vmatprep.subr.mxu0 0.0
  %1015 = vmatpush2.msra.mxu0 0.0
  %1016 = vmatprep.subr.mxu0 0.0
  %1017 = vmatpush2.msra.mxu0 0.0
  %1018 = vmatprep.subr.mxu0 0.0
  %1019 = vmatpush2.msra.mxu0 0.0
  %1020 = vmatprep.subr.mxu0 0.0
  %1021 = vmatpush2.msra.mxu0 0.0
  %1022 = vmatprep.subr.mxu0 0.0
  %1023 = vmatpush2.msra.mxu0 0.0
  %1024 = vmatprep.subr.mxu0 0.0
  %1025 = vmatpush2.msra.mxu0 0.0
  %1026 = vmatprep.subr.mxu0 0.0
  %1027 = vmatpush2.msra.mxu0 0.0
  %1028 = vmatprep.subr.mxu0 0.0
  %1029 = vmatpush2.msra.mxu0 0.0
  %1030 = vmatprep.subr.mxu0 0.0
  %1031 = vmatpush2.msra.mxu0 0.0
  %1032 = vmatprep.subr.mxu0 0.0
  %1033 = vmatpush2.msra.mxu0 0.0
  %1034 = vmatprep.subr.mxu0 0.0
  %1035 = vmatpush2.msra.mxu0 0.0
  %1036 = vmatprep.subr.mxu0 0.0
  %1037 = vmatpush2.msra.mxu0 0.0
  %1038 = vmatprep.subr.mxu0 0.0
  %1039 = vmatpush2.msra.mxu0 0.0
  %1040 = vmatprep.subr.mxu0 0.0
  %1041 = vmatpush2.msra.mxu0 0.0
  %1042 = vmatprep.mubr.f32.mxu0 0.0
  %1043 = vmatmul.mubr.f32.gmra.mxu0 %v976
  %v1044 = vpop.f32.mrf.mxu0
  %v1045 = vadd.f32 0.0, %v1044
  %v1046 = vpop.f32.mrf.mxu0
  %v1047 = vadd.f32 0.0, %v1046
  %1048 = vdwg.mxu0
  %v1051 = vrot.slane %v1045, 2
  %v1052 = vrot.slane %v1047, 2
  %v1055 = vadd.f32 %v971, %v1051
  %v1056 = vadd.f32 %v972, %v1052
  %v1057 = vxor.u32 %v1055, 2147483648
  %v1058 = vxor.u32 %v1056, 2147483648
  %v1059 = vmul.f32 %v1057, 1.442695
  %v1060 = vpow.pop %v1059
  %v1061 = vmul.f32 %v1058, 1.442695
  %v1062 = vpow.pop %v1061
  %v1063 = vadd.f32 %v1060, 1.0
  %v1064 = vadd.f32 %v1062, 1.0
  %v1065 = vrcp.pop %v1063
  %v1066 = vmul.f32 1.0, %v1065
  %v1067 = vrcp.pop %v1064
  %v1068 = vmul.f32 1.0, %v1067
  %v1069 = vtanh.pop %v1056
  %v1071 = vrot.slane %v962, 6
  %v1073 = vmul.f32 %v1066, %v1071
  %v1074 = vmul.f32 %v1066, %v1069
  %1076 = vrot.lane.b32.xlu0 %v1074, 64
  %v1077 = vpop.permute.xlu0 %1076
  %v1079 = vadd.f32 %v1073, %v1077
  %v1080 = vtanh.pop %v1079
  %v1081 = vmul.f32 %v1068, %v1080
  %1083 = vrot.lane.b32.xlu0 %v1081, 64
  %v1084 = vpop.permute.xlu0 %1083
  %1086 = vst.msk [vmem:[#allocation3 + $0x8] sm:$0xc0] %vm625, %v1084
  %1087 = vst.msk [vmem:[#allocation3 - $0x6] sm:$0xc0] %vm627, %v1081
  %v1088 = vld [vmem:[#allocation3] sm:$0xff]
  %v1089 = vld [vmem:[#allocation3 + $0x8] sm:$0xff]
  %v1090 = vld [vmem:[%s4] sm:$0xff]
  %v1091 = vld [vmem:[%s4 + $0x8] sm:$0xff]
  %v1092 = vld [vmem:[%s4 + $0x10] sm:$0xff]
  %v1093 = vld [vmem:[%s4 + $0x18] sm:$0xff]
  %v1094 = vld [vmem:[%s4 + $0x20] sm:$0xff]
  %v1095 = vld [vmem:[%s4 + $0x28] sm:$0xff]
  %v1096 = vld [vmem:[%s4 + $0x30] sm:$0xff]
  %v1097 = vld [vmem:[%s4 + $0x38] sm:$0xff]
  %v1098 = vld [vmem:[%s4 + $0x40] sm:$0xff]
  %v1099 = vld [vmem:[%s4 + $0x48] sm:$0xff]
  %v1100 = vld [vmem:[%s4 + $0x50] sm:$0xff]
  %v1101 = vld [vmem:[%s4 + $0x58] sm:$0xff]
  %v1102 = vld [vmem:[%s4 + $0x60] sm:$0xff]
  %v1103 = vld [vmem:[%s4 + $0x68] sm:$0xff]
  %v1104 = vld [vmem:[%s4 + $0x70] sm:$0xff]
  %v1105 = vld [vmem:[%s4 + $0x78] sm:$0xff]
  %v1106 = vld [vmem:[%s4 + $0x80] sm:$0xff]
  %v1107 = vld [vmem:[%s4 + $0x88] sm:$0xff]
  %v1108 = vld [vmem:[%s4 + $0x90] sm:$0xff]
  %v1109 = vld [vmem:[%s4 + $0x98] sm:$0xff]
  %v1110 = vld [vmem:[%s4 + $0xa0] sm:$0xff]
  %v1111 = vld [vmem:[%s4 + $0xa8] sm:$0xff]
  %v1112 = vld [vmem:[%s4 + $0xb0] sm:$0xff]
  %v1113 = vld [vmem:[%s4 + $0xb8] sm:$0xff]
  %v1114 = vld [vmem:[%s4 + $0xc0] sm:$0xff]
  %v1115 = vld [vmem:[%s4 + $0xc8] sm:$0xff]
  %v1116 = vld [vmem:[%s4 + $0xd0] sm:$0xff]
  %v1117 = vld [vmem:[%s4 + $0xd8] sm:$0xff]
  %v1118 = vld [vmem:[%s4 + $0xe0] sm:$0xff]
  %v1119 = vld [vmem:[%s4 + $0xe8] sm:$0xff]
  %v1120 = vld [vmem:[%s4 + $0xf0] sm:$0xff]
  %v1121 = vld [vmem:[%s4 + $0xf8] sm:$0xff]
  %v1122 = vld [vmem:[%s5] sm:$0xff]
  %v1123 = vld [vmem:[%s5 + $0x8] sm:$0xff]
  %v1124 = vld [vmem:[%s5 + $0x10] sm:$0xff]
  %v1125 = vld [vmem:[%s5 + $0x18] sm:$0xff]
  %v1126 = vld [vmem:[%s5 + $0x20] sm:$0xff]
  %v1127 = vld [vmem:[%s5 + $0x28] sm:$0xff]
  %v1128 = vld [vmem:[%s5 + $0x30] sm:$0xff]
  %v1129 = vld [vmem:[%s5 + $0x38] sm:$0xff]
  %v1130 = vld [vmem:[%s5 + $0x40] sm:$0xff]
  %v1131 = vld [vmem:[%s5 + $0x48] sm:$0xff]
  %v1132 = vld [vmem:[%s5 + $0x50] sm:$0xff]
  %v1133 = vld [vmem:[%s5 + $0x58] sm:$0xff]
  %v1134 = vld [vmem:[%s5 + $0x60] sm:$0xff]
  %v1135 = vld [vmem:[%s5 + $0x68] sm:$0xff]
  %v1136 = vld [vmem:[%s5 + $0x70] sm:$0xff]
  %v1137 = vld [vmem:[%s5 + $0x78] sm:$0xff]
  %v1138 = vld [vmem:[%s6] sm:$0x3]
  %v1140 = vlaneseq
  %v1141 = vshrl.u32 %v1140, 7
  %v1142 = vsub.s32 0, %v1141
  %v1143 = vrot.slane %v1138, %v1142
  %v1144 = vlaneseq
  %v1145 = vshrl.u32 %v1144, 7
  %v1146 = vsub.s32 1, %v1145
  %v1147 = vrot.slane %v1138, %v1146
  %1150 = vmatprep.subr.mxu0 %v1121
  %1151 = vmatpush1.msra.mxu0 %v1120
  %1152 = vmatprep.subr.mxu0 %v1119
  %1153 = vmatpush1.msra.mxu0 %v1118
  %1154 = vmatprep.subr.mxu0 %v1117
  %1155 = vmatpush1.msra.mxu0 %v1116
  %1156 = vmatprep.subr.mxu0 %v1115
  %1157 = vmatpush1.msra.mxu0 %v1114
  %1158 = vmatprep.subr.mxu0 %v1113
  %1159 = vmatpush1.msra.mxu0 %v1112
  %1160 = vmatprep.subr.mxu0 %v1111
  %1161 = vmatpush1.msra.mxu0 %v1110
  %1162 = vmatprep.subr.mxu0 %v1109
  %1163 = vmatpush1.msra.mxu0 %v1108
  %1164 = vmatprep.subr.mxu0 %v1107
  %1165 = vmatpush1.msra.mxu0 %v1106
  %1166 = vmatprep.subr.mxu0 %v1105
  %1167 = vmatpush1.msra.mxu0 %v1104
  %1168 = vmatprep.subr.mxu0 %v1103
  %1169 = vmatpush1.msra.mxu0 %v1102
  %1170 = vmatprep.subr.mxu0 %v1101
  %1171 = vmatpush1.msra.mxu0 %v1100
  %1172 = vmatprep.subr.mxu0 %v1099
  %1173 = vmatpush1.msra.mxu0 %v1098
  %1174 = vmatprep.subr.mxu0 %v1097
  %1175 = vmatpush1.msra.mxu0 %v1096
  %1176 = vmatprep.subr.mxu0 %v1095
  %1177 = vmatpush1.msra.mxu0 %v1094
  %1178 = vmatprep.subr.mxu0 %v1093
  %1179 = vmatpush1.msra.mxu0 %v1092
  %1180 = vmatprep.subr.mxu0 %v1091
  %1181 = vmatpush1.msra.mxu0 %v1090
  %1182 = vmatprep.subr.mxu0 0.0
  %1183 = vmatpush2.msra.mxu0 0.0
  %1184 = vmatprep.subr.mxu0 0.0
  %1185 = vmatpush2.msra.mxu0 0.0
  %1186 = vmatprep.subr.mxu0 0.0
  %1187 = vmatpush2.msra.mxu0 0.0
  %1188 = vmatprep.subr.mxu0 0.0
  %1189 = vmatpush2.msra.mxu0 0.0
  %1190 = vmatprep.subr.mxu0 0.0
  %1191 = vmatpush2.msra.mxu0 0.0
  %1192 = vmatprep.subr.mxu0 0.0
  %1193 = vmatpush2.msra.mxu0 0.0
  %1194 = vmatprep.subr.mxu0 0.0
  %1195 = vmatpush2.msra.mxu0 0.0
  %1196 = vmatprep.subr.mxu0 0.0
  %1197 = vmatpush2.msra.mxu0 0.0
  %1198 = vmatprep.subr.mxu0 0.0
  %1199 = vmatpush2.msra.mxu0 0.0
  %1200 = vmatprep.subr.mxu0 0.0
  %1201 = vmatpush2.msra.mxu0 0.0
  %1202 = vmatprep.subr.mxu0 0.0
  %1203 = vmatpush2.msra.mxu0 0.0
  %1204 = vmatprep.subr.mxu0 0.0
  %1205 = vmatpush2.msra.mxu0 0.0
  %1206 = vmatprep.subr.mxu0 0.0
  %1207 = vmatpush2.msra.mxu0 0.0
  %1208 = vmatprep.subr.mxu0 0.0
  %1209 = vmatpush2.msra.mxu0 0.0
  %1210 = vmatprep.subr.mxu0 0.0
  %1211 = vmatpush2.msra.mxu0 0.0
  %1212 = vmatprep.subr.mxu0 0.0
  %1213 = vmatpush2.msra.mxu0 0.0
  %1214 = vmatprep.mubr.f32.mxu0 0.0
  %1215 = vmatmul.mubr.f32.gmra.mxu0 %v1088
  %v1216 = vpop.f32.mrf.mxu0
  %v1217 = vadd.f32 %v1143, %v1216
  %v1218 = vpop.f32.mrf.mxu0
  %v1219 = vadd.f32 %v1147, %v1218
  %1220 = vmatprep.mubr.f32.mxu0 0.0
  %1221 = vmatmul.mubr.f32.gmra.mxu0 %v1089
  %v1222 = vpop.f32.mrf.mxu0
  %v1223 = vadd.f32 %v1143, %v1222
  %v1224 = vpop.f32.mrf.mxu0
  %v1225 = vadd.f32 %v1147, %v1224
  %1226 = vdwg.mxu0
  %1227 = vst [vmem:[#allocation2] sm:$0xff] %v1217
  %1228 = vst [vmem:[#allocation2 + $0x8] sm:$0xff] %v1219
  %1229 = vst [vmem:[#allocation2 + $0x10] sm:$0xff] %v1223
  %1230 = vst [vmem:[#allocation2 + $0x18] sm:$0xff] %v1225
  %v1231 = vld [vmem:[#allocation2] sm:$0x3]
  %v1232 = vld [vmem:[#allocation2 + $0x8] sm:$0x3]
  %1233 = vmatprep.subr.mxu0 0.0
  %1234 = vmatpush1.msra.mxu0 0.0
  %1235 = vmatprep.subr.mxu0 0.0
  %1236 = vmatpush1.msra.mxu0 0.0
  %1237 = vmatprep.subr.mxu0 0.0
  %1238 = vmatpush1.msra.mxu0 0.0
  %1239 = vmatprep.subr.mxu0 0.0
  %1240 = vmatpush1.msra.mxu0 0.0
  %1241 = vmatprep.subr.mxu0 0.0
  %1242 = vmatpush1.msra.mxu0 0.0
  %1243 = vmatprep.subr.mxu0 0.0
  %1244 = vmatpush1.msra.mxu0 0.0
  %1245 = vmatprep.subr.mxu0 0.0
  %1246 = vmatpush1.msra.mxu0 0.0
  %1247 = vmatprep.subr.mxu0 0.0
  %1248 = vmatpush1.msra.mxu0 0.0
  %1249 = vmatprep.subr.mxu0 %v1137
  %1250 = vmatpush1.msra.mxu0 %v1136
  %1251 = vmatprep.subr.mxu0 %v1135
  %1252 = vmatpush1.msra.mxu0 %v1134
  %1253 = vmatprep.subr.mxu0 %v1133
  %1254 = vmatpush1.msra.mxu0 %v1132
  %1255 = vmatprep.subr.mxu0 %v1131
  %1256 = vmatpush1.msra.mxu0 %v1130
  %1257 = vmatprep.subr.mxu0 %v1129
  %1258 = vmatpush1.msra.mxu0 %v1128
  %1259 = vmatprep.subr.mxu0 %v1127
  %1260 = vmatpush1.msra.mxu0 %v1126
  %1261 = vmatprep.subr.mxu0 %v1125
  %1262 = vmatpush1.msra.mxu0 %v1124
  %1263 = vmatprep.subr.mxu0 %v1123
  %1264 = vmatpush1.msra.mxu0 %v1122
  %1265 = vmatprep.subr.mxu0 0.0
  %1266 = vmatpush2.msra.mxu0 0.0
  %1267 = vmatprep.subr.mxu0 0.0
  %1268 = vmatpush2.msra.mxu0 0.0
  %1269 = vmatprep.subr.mxu0 0.0
  %1270 = vmatpush2.msra.mxu0 0.0
  %1271 = vmatprep.subr.mxu0 0.0
  %1272 = vmatpush2.msra.mxu0 0.0
  %1273 = vmatprep.subr.mxu0 0.0
  %1274 = vmatpush2.msra.mxu0 0.0
  %1275 = vmatprep.subr.mxu0 0.0
  %1276 = vmatpush2.msra.mxu0 0.0
  %1277 = vmatprep.subr.mxu0 0.0
  %1278 = vmatpush2.msra.mxu0 0.0
  %1279 = vmatprep.subr.mxu0 0.0
  %1280 = vmatpush2.msra.mxu0 0.0
  %1281 = vmatprep.subr.mxu0 0.0
  %1282 = vmatpush2.msra.mxu0 0.0
  %1283 = vmatprep.subr.mxu0 0.0
  %1284 = vmatpush2.msra.mxu0 0.0
  %1285 = vmatprep.subr.mxu0 0.0
  %1286 = vmatpush2.msra.mxu0 0.0
  %1287 = vmatprep.subr.mxu0 0.0
  %1288 = vmatpush2.msra.mxu0 0.0
  %1289 = vmatprep.subr.mxu0 0.0
  %1290 = vmatpush2.msra.mxu0 0.0
  %1291 = vmatprep.subr.mxu0 0.0
  %1292 = vmatpush2.msra.mxu0 0.0
  %1293 = vmatprep.subr.mxu0 0.0
  %1294 = vmatpush2.msra.mxu0 0.0
  %1295 = vmatprep.subr.mxu0 0.0
  %1296 = vmatpush2.msra.mxu0 0.0
  %1297 = vmatprep.mubr.f32.mxu0 0.0
  %1298 = vmatmul.mubr.f32.gmra.mxu0 %v170
  %v1299 = vpop.f32.mrf.mxu0
  %v1300 = vadd.f32 0.0, %v1299
  %v1301 = vpop.f32.mrf.mxu0
  %v1302 = vadd.f32 0.0, %v1301
  %1303 = vdwg.mxu0
  %v1304 = vadd.f32 %v1231, %v1300
  %v1305 = vadd.f32 %v1232, %v1302
  %v1306 = vxor.u32 %v1304, 2147483648
  %v1307 = vxor.u32 %v1305, 2147483648
  %v1308 = vmul.f32 %v1306, 1.442695
  %v1309 = vpow.pop %v1308
  %v1310 = vmul.f32 %v1307, 1.442695
  %v1311 = vpow.pop %v1310
  %v1312 = vadd.f32 %v1309, 1.0
  %v1313 = vadd.f32 %v1311, 1.0
  %v1314 = vrcp.pop %v1312
  %v1315 = vmul.f32 1.0, %v1314
  %v1316 = vrcp.pop %v1313
  %v1317 = vmul.f32 1.0, %v1316
  %v1318 = vtanh.pop %v1305
  %v1319 = vmul.f32 %v1315, 0.0
  %v1320 = vmul.f32 %v1315, %v1318
  %1322 = vrot.lane.b32.xlu0 %v1320, 64
  %v1323 = vpop.permute.xlu0 %1322
  %v1325 = vadd.f32 %v1319, %v1323
  %v1326 = vtanh.pop %v1325
  %v1327 = vmul.f32 %v1317, %v1326
  %1329 = vrot.lane.b32.xlu0 %v1327, 64
  %v1330 = vpop.permute.xlu0 %1329
  %1332 = vst.msk [vmem:[#allocation3] sm:$0x3] %vm271, %v1330
  %1333 = vst.msk [vmem:[#allocation3 + $0xe] sm:$0x3] %vm273, %v1327
  %v1334 = vld [vmem:[#allocation2] sm:$0xc]
  %v1335 = vld [vmem:[#allocation2 + $0x8] sm:$0xc]
  %v1336 = vsel %vm168, %v1330, 0
  %1338 = vmatprep.subr.mxu0 0.0
  %1339 = vmatpush1.msra.mxu0 0.0
  %1340 = vmatprep.subr.mxu0 0.0
  %1341 = vmatpush1.msra.mxu0 0.0
  %1342 = vmatprep.subr.mxu0 0.0
  %1343 = vmatpush1.msra.mxu0 0.0
  %1344 = vmatprep.subr.mxu0 0.0
  %1345 = vmatpush1.msra.mxu0 0.0
  %1346 = vmatprep.subr.mxu0 0.0
  %1347 = vmatpush1.msra.mxu0 0.0
  %1348 = vmatprep.subr.mxu0 0.0
  %1349 = vmatpush1.msra.mxu0 0.0
  %1350 = vmatprep.subr.mxu0 0.0
  %1351 = vmatpush1.msra.mxu0 0.0
  %1352 = vmatprep.subr.mxu0 0.0
  %1353 = vmatpush1.msra.mxu0 0.0
  %1354 = vmatprep.subr.mxu0 %v1137
  %1355 = vmatpush1.msra.mxu0 %v1136
  %1356 = vmatprep.subr.mxu0 %v1135
  %1357 = vmatpush1.msra.mxu0 %v1134
  %1358 = vmatprep.subr.mxu0 %v1133
  %1359 = vmatpush1.msra.mxu0 %v1132
  %1360 = vmatprep.subr.mxu0 %v1131
  %1361 = vmatpush1.msra.mxu0 %v1130
  %1362 = vmatprep.subr.mxu0 %v1129
  %1363 = vmatpush1.msra.mxu0 %v1128
  %1364 = vmatprep.subr.mxu0 %v1127
  %1365 = vmatpush1.msra.mxu0 %v1126
  %1366 = vmatprep.subr.mxu0 %v1125
  %1367 = vmatpush1.msra.mxu0 %v1124
  %1368 = vmatprep.subr.mxu0 %v1123
  %1369 = vmatpush1.msra.mxu0 %v1122
  %1370 = vmatprep.subr.mxu0 0.0
  %1371 = vmatpush2.msra.mxu0 0.0
  %1372 = vmatprep.subr.mxu0 0.0
  %1373 = vmatpush2.msra.mxu0 0.0
  %1374 = vmatprep.subr.mxu0 0.0
  %1375 = vmatpush2.msra.mxu0 0.0
  %1376 = vmatprep.subr.mxu0 0.0
  %1377 = vmatpush2.msra.mxu0 0.0
  %1378 = vmatprep.subr.mxu0 0.0
  %1379 = vmatpush2.msra.mxu0 0.0
  %1380 = vmatprep.subr.mxu0 0.0
  %1381 = vmatpush2.msra.mxu0 0.0
  %1382 = vmatprep.subr.mxu0 0.0
  %1383 = vmatpush2.msra.mxu0 0.0
  %1384 = vmatprep.subr.mxu0 0.0
  %1385 = vmatpush2.msra.mxu0 0.0
  %1386 = vmatprep.subr.mxu0 0.0
  %1387 = vmatpush2.msra.mxu0 0.0
  %1388 = vmatprep.subr.mxu0 0.0
  %1389 = vmatpush2.msra.mxu0 0.0
  %1390 = vmatprep.subr.mxu0 0.0
  %1391 = vmatpush2.msra.mxu0 0.0
  %1392 = vmatprep.subr.mxu0 0.0
  %1393 = vmatpush2.msra.mxu0 0.0
  %1394 = vmatprep.subr.mxu0 0.0
  %1395 = vmatpush2.msra.mxu0 0.0
  %1396 = vmatprep.subr.mxu0 0.0
  %1397 = vmatpush2.msra.mxu0 0.0
  %1398 = vmatprep.subr.mxu0 0.0
  %1399 = vmatpush2.msra.mxu0 0.0
  %1400 = vmatprep.subr.mxu0 0.0
  %1401 = vmatpush2.msra.mxu0 0.0
  %1402 = vmatprep.mubr.f32.mxu0 0.0
  %1403 = vmatmul.mubr.f32.gmra.mxu0 %v1336
  %v1404 = vpop.f32.mrf.mxu0
  %v1405 = vadd.f32 0.0, %v1404
  %v1406 = vpop.f32.mrf.mxu0
  %v1407 = vadd.f32 0.0, %v1406
  %1408 = vdwg.mxu0
  %v1411 = vrot.slane %v1405, 6
  %v1412 = vrot.slane %v1407, 6
  %v1415 = vadd.f32 %v1334, %v1411
  %v1416 = vadd.f32 %v1335, %v1412
  %v1417 = vxor.u32 %v1415, 2147483648
  %v1418 = vxor.u32 %v1416, 2147483648
  %v1419 = vmul.f32 %v1417, 1.442695
  %v1420 = vpow.pop %v1419
  %v1421 = vmul.f32 %v1418, 1.442695
  %v1422 = vpow.pop %v1421
  %v1423 = vadd.f32 %v1420, 1.0
  %v1424 = vadd.f32 %v1422, 1.0
  %v1425 = vrcp.pop %v1423
  %v1426 = vmul.f32 1.0, %v1425
  %v1427 = vrcp.pop %v1424
  %v1428 = vmul.f32 1.0, %v1427
  %v1429 = vtanh.pop %v1416
  %v1431 = vrot.slane %v1325, 6
  %v1433 = vmul.f32 %v1426, %v1431
  %v1434 = vmul.f32 %v1426, %v1429
  %1436 = vrot.lane.b32.xlu0 %v1434, 64
  %v1437 = vpop.permute.xlu0 %1436
  %v1439 = vadd.f32 %v1433, %v1437
  %v1440 = vtanh.pop %v1439
  %v1441 = vmul.f32 %v1428, %v1440
  %1443 = vrot.lane.b32.xlu0 %v1441, 64
  %v1444 = vpop.permute.xlu0 %1443
  %1446 = vst.msk [vmem:[#allocation3] sm:$0xc] %vm387, %v1444
  %1447 = vst.msk [vmem:[#allocation3 + $0xa] sm:$0xc] %vm389, %v1441
  %v1448 = vld [vmem:[#allocation2] sm:$0x30]
  %v1449 = vld [vmem:[#allocation2 + $0x8] sm:$0x30]
  %v1450 = vrot.slane %v1441, 2
  %1451 = vrot.lane.b32.xlu0 %v1450, 64
  %v1452 = vpop.permute.xlu0 %1451
  %v1453 = vsel %vm168, %v1452, 0
  %1455 = vmatprep.subr.mxu0 0.0
  %1456 = vmatpush1.msra.mxu0 0.0
  %1457 = vmatprep.subr.mxu0 0.0
  %1458 = vmatpush1.msra.mxu0 0.0
  %1459 = vmatprep.subr.mxu0 0.0
  %1460 = vmatpush1.msra.mxu0 0.0
  %1461 = vmatprep.subr.mxu0 0.0
  %1462 = vmatpush1.msra.mxu0 0.0
  %1463 = vmatprep.subr.mxu0 0.0
  %1464 = vmatpush1.msra.mxu0 0.0
  %1465 = vmatprep.subr.mxu0 0.0
  %1466 = vmatpush1.msra.mxu0 0.0
  %1467 = vmatprep.subr.mxu0 0.0
  %1468 = vmatpush1.msra.mxu0 0.0
  %1469 = vmatprep.subr.mxu0 0.0
  %1470 = vmatpush1.msra.mxu0 0.0
  %1471 = vmatprep.subr.mxu0 %v1137
  %1472 = vmatpush1.msra.mxu0 %v1136
  %1473 = vmatprep.subr.mxu0 %v1135
  %1474 = vmatpush1.msra.mxu0 %v1134
  %1475 = vmatprep.subr.mxu0 %v1133
  %1476 = vmatpush1.msra.mxu0 %v1132
  %1477 = vmatprep.subr.mxu0 %v1131
  %1478 = vmatpush1.msra.mxu0 %v1130
  %1479 = vmatprep.subr.mxu0 %v1129
  %1480 = vmatpush1.msra.mxu0 %v1128
  %1481 = vmatprep.subr.mxu0 %v1127
  %1482 = vmatpush1.msra.mxu0 %v1126
  %1483 = vmatprep.subr.mxu0 %v1125
  %1484 = vmatpush1.msra.mxu0 %v1124
  %1485 = vmatprep.subr.mxu0 %v1123
  %1486 = vmatpush1.msra.mxu0 %v1122
  %1487 = vmatprep.subr.mxu0 0.0
  %1488 = vmatpush2.msra.mxu0 0.0
  %1489 = vmatprep.subr.mxu0 0.0
  %1490 = vmatpush2.msra.mxu0 0.0
  %1491 = vmatprep.subr.mxu0 0.0
  %1492 = vmatpush2.msra.mxu0 0.0
  %1493 = vmatprep.subr.mxu0 0.0
  %1494 = vmatpush2.msra.mxu0 0.0
  %1495 = vmatprep.subr.mxu0 0.0
  %1496 = vmatpush2.msra.mxu0 0.0
  %1497 = vmatprep.subr.mxu0 0.0
  %1498 = vmatpush2.msra.mxu0 0.0
  %1499 = vmatprep.subr.mxu0 0.0
  %1500 = vmatpush2.msra.mxu0 0.0
  %1501 = vmatprep.subr.mxu0 0.0
  %1502 = vmatpush2.msra.mxu0 0.0
  %1503 = vmatprep.subr.mxu0 0.0
  %1504 = vmatpush2.msra.mxu0 0.0
  %1505 = vmatprep.subr.mxu0 0.0
  %1506 = vmatpush2.msra.mxu0 0.0
  %1507 = vmatprep.subr.mxu0 0.0
  %1508 = vmatpush2.msra.mxu0 0.0
  %1509 = vmatprep.subr.mxu0 0.0
  %1510 = vmatpush2.msra.mxu0 0.0
  %1511 = vmatprep.subr.mxu0 0.0
  %1512 = vmatpush2.msra.mxu0 0.0
  %1513 = vmatprep.subr.mxu0 0.0
  %1514 = vmatpush2.msra.mxu0 0.0
  %1515 = vmatprep.subr.mxu0 0.0
  %1516 = vmatpush2.msra.mxu0 0.0
  %1517 = vmatprep.subr.mxu0 0.0
  %1518 = vmatpush2.msra.mxu0 0.0
  %1519 = vmatprep.mubr.f32.mxu0 0.0
  %1520 = vmatmul.mubr.f32.gmra.mxu0 %v1453
  %v1521 = vpop.f32.mrf.mxu0
  %v1522 = vadd.f32 0.0, %v1521
  %v1523 = vpop.f32.mrf.mxu0
  %v1524 = vadd.f32 0.0, %v1523
  %1525 = vdwg.mxu0
  %v1528 = vrot.slane %v1522, 4
  %v1529 = vrot.slane %v1524, 4
  %v1532 = vadd.f32 %v1448, %v1528
  %v1533 = vadd.f32 %v1449, %v1529
  %v1534 = vxor.u32 %v1532, 2147483648
  %v1535 = vxor.u32 %v1533, 2147483648
  %v1536 = vmul.f32 %v1534, 1.442695
  %v1537 = vpow.pop %v1536
  %v1538 = vmul.f32 %v1535, 1.442695
  %v1539 = vpow.pop %v1538
  %v1540 = vadd.f32 %v1537, 1.0
  %v1541 = vadd.f32 %v1539, 1.0
  %v1542 = vrcp.pop %v1540
  %v1543 = vmul.f32 1.0, %v1542
  %v1544 = vrcp.pop %v1541
  %v1545 = vmul.f32 1.0, %v1544
  %v1546 = vtanh.pop %v1533
  %v1548 = vrot.slane %v1439, 6
  %v1550 = vmul.f32 %v1543, %v1548
  %v1551 = vmul.f32 %v1543, %v1546
  %1553 = vrot.lane.b32.xlu0 %v1551, 64
  %v1554 = vpop.permute.xlu0 %1553
  %v1556 = vadd.f32 %v1550, %v1554
  %v1557 = vtanh.pop %v1556
  %v1558 = vmul.f32 %v1545, %v1557
  %1560 = vrot.lane.b32.xlu0 %v1558, 64
  %v1561 = vpop.permute.xlu0 %1560
  %1563 = vst.msk [vmem:[#allocation3] sm:$0x30] %vm506, %v1561
  %1564 = vst.msk [vmem:[#allocation3 + $0x6] sm:$0x30] %vm508, %v1558
  %v1565 = vld [vmem:[#allocation2] sm:$0xc0]
  %v1566 = vld [vmem:[#allocation2 + $0x8] sm:$0xc0]
  %v1567 = vrot.slane %v1558, 4
  %1568 = vrot.lane.b32.xlu0 %v1567, 64
  %v1569 = vpop.permute.xlu0 %1568
  %v1570 = vsel %vm168, %v1569, 0
  %1572 = vmatprep.subr.mxu0 0.0
  %1573 = vmatpush1.msra.mxu0 0.0
  %1574 = vmatprep.subr.mxu0 0.0
  %1575 = vmatpush1.msra.mxu0 0.0
  %1576 = vmatprep.subr.mxu0 0.0
  %1577 = vmatpush1.msra.mxu0 0.0
  %1578 = vmatprep.subr.mxu0 0.0
  %1579 = vmatpush1.msra.mxu0 0.0
  %1580 = vmatprep.subr.mxu0 0.0
  %1581 = vmatpush1.msra.mxu0 0.0
  %1582 = vmatprep.subr.mxu0 0.0
  %1583 = vmatpush1.msra.mxu0 0.0
  %1584 = vmatprep.subr.mxu0 0.0
  %1585 = vmatpush1.msra.mxu0 0.0
  %1586 = vmatprep.subr.mxu0 0.0
  %1587 = vmatpush1.msra.mxu0 0.0
  %1588 = vmatprep.subr.mxu0 %v1137
  %1589 = vmatpush1.msra.mxu0 %v1136
  %1590 = vmatprep.subr.mxu0 %v1135
  %1591 = vmatpush1.msra.mxu0 %v1134
  %1592 = vmatprep.subr.mxu0 %v1133
  %1593 = vmatpush1.msra.mxu0 %v1132
  %1594 = vmatprep.subr.mxu0 %v1131
  %1595 = vmatpush1.msra.mxu0 %v1130
  %1596 = vmatprep.subr.mxu0 %v1129
  %1597 = vmatpush1.msra.mxu0 %v1128
  %1598 = vmatprep.subr.mxu0 %v1127
  %1599 = vmatpush1.msra.mxu0 %v1126
  %1600 = vmatprep.subr.mxu0 %v1125
  %1601 = vmatpush1.msra.mxu0 %v1124
  %1602 = vmatprep.subr.mxu0 %v1123
  %1603 = vmatpush1.msra.mxu0 %v1122
  %1604 = vmatprep.subr.mxu0 0.0
  %1605 = vmatpush2.msra.mxu0 0.0
  %1606 = vmatprep.subr.mxu0 0.0
  %1607 = vmatpush2.msra.mxu0 0.0
  %1608 = vmatprep.subr.mxu0 0.0
  %1609 = vmatpush2.msra.mxu0 0.0
  %1610 = vmatprep.subr.mxu0 0.0
  %1611 = vmatpush2.msra.mxu0 0.0
  %1612 = vmatprep.subr.mxu0 0.0
  %1613 = vmatpush2.msra.mxu0 0.0
  %1614 = vmatprep.subr.mxu0 0.0
  %1615 = vmatpush2.msra.mxu0 0.0
  %1616 = vmatprep.subr.mxu0 0.0
  %1617 = vmatpush2.msra.mxu0 0.0
  %1618 = vmatprep.subr.mxu0 0.0
  %1619 = vmatpush2.msra.mxu0 0.0
  %1620 = vmatprep.subr.mxu0 0.0
  %1621 = vmatpush2.msra.mxu0 0.0
  %1622 = vmatprep.subr.mxu0 0.0
  %1623 = vmatpush2.msra.mxu0 0.0
  %1624 = vmatprep.subr.mxu0 0.0
  %1625 = vmatpush2.msra.mxu0 0.0
  %1626 = vmatprep.subr.mxu0 0.0
  %1627 = vmatpush2.msra.mxu0 0.0
  %1628 = vmatprep.subr.mxu0 0.0
  %1629 = vmatpush2.msra.mxu0 0.0
  %1630 = vmatprep.subr.mxu0 0.0
  %1631 = vmatpush2.msra.mxu0 0.0
  %1632 = vmatprep.subr.mxu0 0.0
  %1633 = vmatpush2.msra.mxu0 0.0
  %1634 = vmatprep.subr.mxu0 0.0
  %1635 = vmatpush2.msra.mxu0 0.0
  %1636 = vmatprep.mubr.f32.mxu0 0.0
  %1637 = vmatmul.mubr.f32.gmra.mxu0 %v1570
  %v1638 = vpop.f32.mrf.mxu0
  %v1639 = vadd.f32 0.0, %v1638
  %v1640 = vpop.f32.mrf.mxu0
  %v1641 = vadd.f32 0.0, %v1640
  %1642 = vdwg.mxu0
  %v1645 = vrot.slane %v1639, 2
  %v1646 = vrot.slane %v1641, 2
  %v1649 = vadd.f32 %v1565, %v1645
  %v1650 = vadd.f32 %v1566, %v1646
  %v1651 = vxor.u32 %v1649, 2147483648
  %v1652 = vxor.u32 %v1650, 2147483648
  %v1653 = vmul.f32 %v1651, 1.442695
  %v1654 = vpow.pop %v1653
  %v1655 = vmul.f32 %v1652, 1.442695
  %v1656 = vpow.pop %v1655
  %v1657 = vadd.f32 %v1654, 1.0
  %v1658 = vadd.f32 %v1656, 1.0
  %v1659 = vrcp.pop %v1657
  %v1660 = vmul.f32 1.0, %v1659
  %v1661 = vrcp.pop %v1658
  %v1662 = vmul.f32 1.0, %v1661
  %v1663 = vtanh.pop %v1650
  %v1665 = vrot.slane %v1556, 6
  %v1667 = vmul.f32 %v1660, %v1665
  %v1668 = vmul.f32 %v1660, %v1663
  %1670 = vrot.lane.b32.xlu0 %v1668, 64
  %v1671 = vpop.permute.xlu0 %1670
  %v1673 = vadd.f32 %v1667, %v1671
  %v1674 = vtanh.pop %v1673
  %v1675 = vmul.f32 %v1662, %v1674
  %1677 = vrot.lane.b32.xlu0 %v1675, 64
  %v1678 = vpop.permute.xlu0 %1677
  %1680 = vst.msk [vmem:[#allocation3] sm:$0xc0] %vm625, %v1678
  %1681 = vst.msk [vmem:[#allocation3 + $0x2] sm:$0xc0] %vm627, %v1675
  %v1682 = vld [vmem:[#allocation2 + $0x10] sm:$0x3]
  %v1683 = vld [vmem:[#allocation2 + $0x18] sm:$0x3]
  %v1684 = vrot.slane %v1675, 6
  %1685 = vrot.lane.b32.xlu0 %v1684, 64
  %v1686 = vpop.permute.xlu0 %1685
  %v1687 = vsel %vm168, %v1686, 0
  %1689 = vmatprep.subr.mxu0 0.0
  %1690 = vmatpush1.msra.mxu0 0.0
  %1691 = vmatprep.subr.mxu0 0.0
  %1692 = vmatpush1.msra.mxu0 0.0
  %1693 = vmatprep.subr.mxu0 0.0
  %1694 = vmatpush1.msra.mxu0 0.0
  %1695 = vmatprep.subr.mxu0 0.0
  %1696 = vmatpush1.msra.mxu0 0.0
  %1697 = vmatprep.subr.mxu0 0.0
  %1698 = vmatpush1.msra.mxu0 0.0
  %1699 = vmatprep.subr.mxu0 0.0
  %1700 = vmatpush1.msra.mxu0 0.0
  %1701 = vmatprep.subr.mxu0 0.0
  %1702 = vmatpush1.msra.mxu0 0.0
  %1703 = vmatprep.subr.mxu0 0.0
  %1704 = vmatpush1.msra.mxu0 0.0
  %1705 = vmatprep.subr.mxu0 %v1137
  %1706 = vmatpush1.msra.mxu0 %v1136
  %1707 = vmatprep.subr.mxu0 %v1135
  %1708 = vmatpush1.msra.mxu0 %v1134
  %1709 = vmatprep.subr.mxu0 %v1133
  %1710 = vmatpush1.msra.mxu0 %v1132
  %1711 = vmatprep.subr.mxu0 %v1131
  %1712 = vmatpush1.msra.mxu0 %v1130
  %1713 = vmatprep.subr.mxu0 %v1129
  %1714 = vmatpush1.msra.mxu0 %v1128
  %1715 = vmatprep.subr.mxu0 %v1127
  %1716 = vmatpush1.msra.mxu0 %v1126
  %1717 = vmatprep.subr.mxu0 %v1125
  %1718 = vmatpush1.msra.mxu0 %v1124
  %1719 = vmatprep.subr.mxu0 %v1123
  %1720 = vmatpush1.msra.mxu0 %v1122
  %1721 = vmatprep.subr.mxu0 0.0
  %1722 = vmatpush2.msra.mxu0 0.0
  %1723 = vmatprep.subr.mxu0 0.0
  %1724 = vmatpush2.msra.mxu0 0.0
  %1725 = vmatprep.subr.mxu0 0.0
  %1726 = vmatpush2.msra.mxu0 0.0
  %1727 = vmatprep.subr.mxu0 0.0
  %1728 = vmatpush2.msra.mxu0 0.0
  %1729 = vmatprep.subr.mxu0 0.0
  %1730 = vmatpush2.msra.mxu0 0.0
  %1731 = vmatprep.subr.mxu0 0.0
  %1732 = vmatpush2.msra.mxu0 0.0
  %1733 = vmatprep.subr.mxu0 0.0
  %1734 = vmatpush2.msra.mxu0 0.0
  %1735 = vmatprep.subr.mxu0 0.0
  %1736 = vmatpush2.msra.mxu0 0.0
  %1737 = vmatprep.subr.mxu0 0.0
  %1738 = vmatpush2.msra.mxu0 0.0
  %1739 = vmatprep.subr.mxu0 0.0
  %1740 = vmatpush2.msra.mxu0 0.0
  %1741 = vmatprep.subr.mxu0 0.0
  %1742 = vmatpush2.msra.mxu0 0.0
  %1743 = vmatprep.subr.mxu0 0.0
  %1744 = vmatpush2.msra.mxu0 0.0
  %1745 = vmatprep.subr.mxu0 0.0
  %1746 = vmatpush2.msra.mxu0 0.0
  %1747 = vmatprep.subr.mxu0 0.0
  %1748 = vmatpush2.msra.mxu0 0.0
  %1749 = vmatprep.subr.mxu0 0.0
  %1750 = vmatpush2.msra.mxu0 0.0
  %1751 = vmatprep.subr.mxu0 0.0
  %1752 = vmatpush2.msra.mxu0 0.0
  %1753 = vmatprep.mubr.f32.mxu0 0.0
  %1754 = vmatmul.mubr.f32.gmra.mxu0 %v1687
  %v1755 = vpop.f32.mrf.mxu0
  %v1756 = vadd.f32 0.0, %v1755
  %v1757 = vpop.f32.mrf.mxu0
  %v1758 = vadd.f32 0.0, %v1757
  %1759 = vdwg.mxu0
  %v1760 = vadd.f32 %v1682, %v1756
  %v1761 = vadd.f32 %v1683, %v1758
  %v1762 = vxor.u32 %v1760, 2147483648
  %v1763 = vxor.u32 %v1761, 2147483648
  %v1764 = vmul.f32 %v1762, 1.442695
  %v1765 = vpow.pop %v1764
  %v1766 = vmul.f32 %v1763, 1.442695
  %v1767 = vpow.pop %v1766
  %v1768 = vadd.f32 %v1765, 1.0
  %v1769 = vadd.f32 %v1767, 1.0
  %v1770 = vrcp.pop %v1768
  %v1771 = vmul.f32 1.0, %v1770
  %v1772 = vrcp.pop %v1769
  %v1773 = vmul.f32 1.0, %v1772
  %v1774 = vtanh.pop %v1761
  %v1776 = vrot.slane %v1673, 6
  %v1778 = vmul.f32 %v1771, %v1776
  %v1779 = vmul.f32 %v1771, %v1774
  %1781 = vrot.lane.b32.xlu0 %v1779, 64
  %v1782 = vpop.permute.xlu0 %1781
  %v1784 = vadd.f32 %v1778, %v1782
  %v1785 = vtanh.pop %v1784
  %v1786 = vmul.f32 %v1773, %v1785
  %1788 = vrot.lane.b32.xlu0 %v1786, 64
  %v1789 = vpop.permute.xlu0 %1788
  %1791 = vst.msk [vmem:[#allocation3 + $0x8] sm:$0x3] %vm271, %v1789
  %1792 = vst.msk [vmem:[#allocation3 + $0x6] sm:$0x3] %vm273, %v1786
  %v1793 = vld [vmem:[#allocation2 + $0x10] sm:$0xc]
  %v1794 = vld [vmem:[#allocation2 + $0x18] sm:$0xc]
  %v1795 = vsel %vm168, %v1789, 0
  %1797 = vmatprep.subr.mxu0 0.0
  %1798 = vmatpush1.msra.mxu0 0.0
  %1799 = vmatprep.subr.mxu0 0.0
  %1800 = vmatpush1.msra.mxu0 0.0
  %1801 = vmatprep.subr.mxu0 0.0
  %1802 = vmatpush1.msra.mxu0 0.0
  %1803 = vmatprep.subr.mxu0 0.0
  %1804 = vmatpush1.msra.mxu0 0.0
  %1805 = vmatprep.subr.mxu0 0.0
  %1806 = vmatpush1.msra.mxu0 0.0
  %1807 = vmatprep.subr.mxu0 0.0
  %1808 = vmatpush1.msra.mxu0 0.0
  %1809 = vmatprep.subr.mxu0 0.0
  %1810 = vmatpush1.msra.mxu0 0.0
  %1811 = vmatprep.subr.mxu0 0.0
  %1812 = vmatpush1.msra.mxu0 0.0
  %1813 = vmatprep.subr.mxu0 %v1137
  %1814 = vmatpush1.msra.mxu0 %v1136
  %1815 = vmatprep.subr.mxu0 %v1135
  %1816 = vmatpush1.msra.mxu0 %v1134
  %1817 = vmatprep.subr.mxu0 %v1133
  %1818 = vmatpush1.msra.mxu0 %v1132
  %1819 = vmatprep.subr.mxu0 %v1131
  %1820 = vmatpush1.msra.mxu0 %v1130
  %1821 = vmatprep.subr.mxu0 %v1129
  %1822 = vmatpush1.msra.mxu0 %v1128
  %1823 = vmatprep.subr.mxu0 %v1127
  %1824 = vmatpush1.msra.mxu0 %v1126
  %1825 = vmatprep.subr.mxu0 %v1125
  %1826 = vmatpush1.msra.mxu0 %v1124
  %1827 = vmatprep.subr.mxu0 %v1123
  %1828 = vmatpush1.msra.mxu0 %v1122
  %1829 = vmatprep.subr.mxu0 0.0
  %1830 = vmatpush2.msra.mxu0 0.0
  %1831 = vmatprep.subr.mxu0 0.0
  %1832 = vmatpush2.msra.mxu0 0.0
  %1833 = vmatprep.subr.mxu0 0.0
  %1834 = vmatpush2.msra.mxu0 0.0
  %1835 = vmatprep.subr.mxu0 0.0
  %1836 = vmatpush2.msra.mxu0 0.0
  %1837 = vmatprep.subr.mxu0 0.0
  %1838 = vmatpush2.msra.mxu0 0.0
  %1839 = vmatprep.subr.mxu0 0.0
  %1840 = vmatpush2.msra.mxu0 0.0
  %1841 = vmatprep.subr.mxu0 0.0
  %1842 = vmatpush2.msra.mxu0 0.0
  %1843 = vmatprep.subr.mxu0 0.0
  %1844 = vmatpush2.msra.mxu0 0.0
  %1845 = vmatprep.subr.mxu0 0.0
  %1846 = vmatpush2.msra.mxu0 0.0
  %1847 = vmatprep.subr.mxu0 0.0
  %1848 = vmatpush2.msra.mxu0 0.0
  %1849 = vmatprep.subr.mxu0 0.0
  %1850 = vmatpush2.msra.mxu0 0.0
  %1851 = vmatprep.subr.mxu0 0.0
  %1852 = vmatpush2.msra.mxu0 0.0
  %1853 = vmatprep.subr.mxu0 0.0
  %1854 = vmatpush2.msra.mxu0 0.0
  %1855 = vmatprep.subr.mxu0 0.0
  %1856 = vmatpush2.msra.mxu0 0.0
  %1857 = vmatprep.subr.mxu0 0.0
  %1858 = vmatpush2.msra.mxu0 0.0
  %1859 = vmatprep.subr.mxu0 0.0
  %1860 = vmatpush2.msra.mxu0 0.0
  %1861 = vmatprep.mubr.f32.mxu0 0.0
  %1862 = vmatmul.mubr.f32.gmra.mxu0 %v1795
  %v1863 = vpop.f32.mrf.mxu0
  %v1864 = vadd.f32 0.0, %v1863
  %v1865 = vpop.f32.mrf.mxu0
  %v1866 = vadd.f32 0.0, %v1865
  %1867 = vdwg.mxu0
  %v1870 = vrot.slane %v1864, 6
  %v1871 = vrot.slane %v1866, 6
  %v1874 = vadd.f32 %v1793, %v1870
  %v1875 = vadd.f32 %v1794, %v1871
  %v1876 = vxor.u32 %v1874, 2147483648
  %v1877 = vxor.u32 %v1875, 2147483648
  %v1878 = vmul.f32 %v1876, 1.442695
  %v1879 = vpow.pop %v1878
  %v1880 = vmul.f32 %v1877, 1.442695
  %v1881 = vpow.pop %v1880
  %v1882 = vadd.f32 %v1879, 1.0
  %v1883 = vadd.f32 %v1881, 1.0
  %v1884 = vrcp.pop %v1882
  %v1885 = vmul.f32 1.0, %v1884
  %v1886 = vrcp.pop %v1883
  %v1887 = vmul.f32 1.0, %v1886
  %v1888 = vtanh.pop %v1875
  %v1890 = vrot.slane %v1784, 6
  %v1892 = vmul.f32 %v1885, %v1890
  %v1893 = vmul.f32 %v1885, %v1888
  %1895 = vrot.lane.b32.xlu0 %v1893, 64
  %v1896 = vpop.permute.xlu0 %1895
  %v1898 = vadd.f32 %v1892, %v1896
  %v1899 = vtanh.pop %v1898
  %v1900 = vmul.f32 %v1887, %v1899
  %1902 = vrot.lane.b32.xlu0 %v1900, 64
  %v1903 = vpop.permute.xlu0 %1902
  %1905 = vst.msk [vmem:[#allocation3 + $0x8] sm:$0xc] %vm387, %v1903
  %1906 = vst.msk [vmem:[#allocation3 + $0x2] sm:$0xc] %vm389, %v1900
  %v1907 = vld [vmem:[#allocation2 + $0x10] sm:$0x30]
  %v1908 = vld [vmem:[#allocation2 + $0x18] sm:$0x30]
  %v1909 = vrot.slane %v1900, 2
  %1910 = vrot.lane.b32.xlu0 %v1909, 64
  %v1911 = vpop.permute.xlu0 %1910
  %v1912 = vsel %vm168, %v1911, 0
  %1914 = vmatprep.subr.mxu0 0.0
  %1915 = vmatpush1.msra.mxu0 0.0
  %1916 = vmatprep.subr.mxu0 0.0
  %1917 = vmatpush1.msra.mxu0 0.0
  %1918 = vmatprep.subr.mxu0 0.0
  %1919 = vmatpush1.msra.mxu0 0.0
  %1920 = vmatprep.subr.mxu0 0.0
  %1921 = vmatpush1.msra.mxu0 0.0
  %1922 = vmatprep.subr.mxu0 0.0
  %1923 = vmatpush1.msra.mxu0 0.0
  %1924 = vmatprep.subr.mxu0 0.0
  %1925 = vmatpush1.msra.mxu0 0.0
  %1926 = vmatprep.subr.mxu0 0.0
  %1927 = vmatpush1.msra.mxu0 0.0
  %1928 = vmatprep.subr.mxu0 0.0
  %1929 = vmatpush1.msra.mxu0 0.0
  %1930 = vmatprep.subr.mxu0 %v1137
  %1931 = vmatpush1.msra.mxu0 %v1136
  %1932 = vmatprep.subr.mxu0 %v1135
  %1933 = vmatpush1.msra.mxu0 %v1134
  %1934 = vmatprep.subr.mxu0 %v1133
  %1935 = vmatpush1.msra.mxu0 %v1132
  %1936 = vmatprep.subr.mxu0 %v1131
  %1937 = vmatpush1.msra.mxu0 %v1130
  %1938 = vmatprep.subr.mxu0 %v1129
  %1939 = vmatpush1.msra.mxu0 %v1128
  %1940 = vmatprep.subr.mxu0 %v1127
  %1941 = vmatpush1.msra.mxu0 %v1126
  %1942 = vmatprep.subr.mxu0 %v1125
  %1943 = vmatpush1.msra.mxu0 %v1124
  %1944 = vmatprep.subr.mxu0 %v1123
  %1945 = vmatpush1.msra.mxu0 %v1122
  %1946 = vmatprep.subr.mxu0 0.0
  %1947 = vmatpush2.msra.mxu0 0.0
  %1948 = vmatprep.subr.mxu0 0.0
  %1949 = vmatpush2.msra.mxu0 0.0
  %1950 = vmatprep.subr.mxu0 0.0
  %1951 = vmatpush2.msra.mxu0 0.0
  %1952 = vmatprep.subr.mxu0 0.0
  %1953 = vmatpush2.msra.mxu0 0.0
  %1954 = vmatprep.subr.mxu0 0.0
  %1955 = vmatpush2.msra.mxu0 0.0
  %1956 = vmatprep.subr.mxu0 0.0
  %1957 = vmatpush2.msra.mxu0 0.0
  %1958 = vmatprep.subr.mxu0 0.0
  %1959 = vmatpush2.msra.mxu0 0.0
  %1960 = vmatprep.subr.mxu0 0.0
  %1961 = vmatpush2.msra.mxu0 0.0
  %1962 = vmatprep.subr.mxu0 0.0
  %1963 = vmatpush2.msra.mxu0 0.0
  %1964 = vmatprep.subr.mxu0 0.0
  %1965 = vmatpush2.msra.mxu0 0.0
  %1966 = vmatprep.subr.mxu0 0.0
  %1967 = vmatpush2.msra.mxu0 0.0
  %1968 = vmatprep.subr.mxu0 0.0
  %1969 = vmatpush2.msra.mxu0 0.0
  %1970 = vmatprep.subr.mxu0 0.0
  %1971 = vmatpush2.msra.mxu0 0.0
  %1972 = vmatprep.subr.mxu0 0.0
  %1973 = vmatpush2.msra.mxu0 0.0
  %1974 = vmatprep.subr.mxu0 0.0
  %1975 = vmatpush2.msra.mxu0 0.0
  %1976 = vmatprep.subr.mxu0 0.0
  %1977 = vmatpush2.msra.mxu0 0.0
  %1978 = vmatprep.mubr.f32.mxu0 0.0
  %1979 = vmatmul.mubr.f32.gmra.mxu0 %v1912
  %v1980 = vpop.f32.mrf.mxu0
  %v1981 = vadd.f32 0.0, %v1980
  %v1982 = vpop.f32.mrf.mxu0
  %v1983 = vadd.f32 0.0, %v1982
  %1984 = vdwg.mxu0
  %v1987 = vrot.slane %v1981, 4
  %v1988 = vrot.slane %v1983, 4
  %v1991 = vadd.f32 %v1907, %v1987
  %v1992 = vadd.f32 %v1908, %v1988
  %v1993 = vxor.u32 %v1991, 2147483648
  %v1994 = vxor.u32 %v1992, 2147483648
  %v1995 = vmul.f32 %v1993, 1.442695
  %v1996 = vpow.pop %v1995
  %v1997 = vmul.f32 %v1994, 1.442695
  %v1998 = vpow.pop %v1997
  %v1999 = vadd.f32 %v1996, 1.0
  %v2000 = vadd.f32 %v1998, 1.0
  %v2001 = vrcp.pop %v1999
  %v2002 = vmul.f32 1.0, %v2001
  %v2003 = vrcp.pop %v2000
  %v2004 = vmul.f32 1.0, %v2003
  %v2005 = vtanh.pop %v1992
  %v2007 = vrot.slane %v1898, 6
  %v2009 = vmul.f32 %v2002, %v2007
  %v2010 = vmul.f32 %v2002, %v2005
  %2012 = vrot.lane.b32.xlu0 %v2010, 64
  %v2013 = vpop.permute.xlu0 %2012
  %v2015 = vadd.f32 %v2009, %v2013
  %v2016 = vtanh.pop %v2015
  %v2017 = vmul.f32 %v2004, %v2016
  %2019 = vrot.lane.b32.xlu0 %v2017, 64
  %v2020 = vpop.permute.xlu0 %2019
  %2022 = vst.msk [vmem:[#allocation3 + $0x8] sm:$0x30] %vm506, %v2020
  %2023 = vst.msk [vmem:[#allocation3 - $0x2] sm:$0x30] %vm508, %v2017
  %v2024 = vld [vmem:[#allocation2 + $0x10] sm:$0xc0]
  %v2025 = vld [vmem:[#allocation2 + $0x18] sm:$0xc0]
  %v2026 = vrot.slane %v2017, 4
  %2027 = vrot.lane.b32.xlu0 %v2026, 64
  %v2028 = vpop.permute.xlu0 %2027
  %v2029 = vsel %vm168, %v2028, 0
  %2031 = vmatprep.subr.mxu0 0.0
  %2032 = vmatpush1.msra.mxu0 0.0
  %2033 = vmatprep.subr.mxu0 0.0
  %2034 = vmatpush1.msra.mxu0 0.0
  %2035 = vmatprep.subr.mxu0 0.0
  %2036 = vmatpush1.msra.mxu0 0.0
  %2037 = vmatprep.subr.mxu0 0.0
  %2038 = vmatpush1.msra.mxu0 0.0
  %2039 = vmatprep.subr.mxu0 0.0
  %2040 = vmatpush1.msra.mxu0 0.0
  %2041 = vmatprep.subr.mxu0 0.0
  %2042 = vmatpush1.msra.mxu0 0.0
  %2043 = vmatprep.subr.mxu0 0.0
  %2044 = vmatpush1.msra.mxu0 0.0
  %2045 = vmatprep.subr.mxu0 0.0
  %2046 = vmatpush1.msra.mxu0 0.0
  %2047 = vmatprep.subr.mxu0 %v1137
  %2048 = vmatpush1.msra.mxu0 %v1136
  %2049 = vmatprep.subr.mxu0 %v1135
  %2050 = vmatpush1.msra.mxu0 %v1134
  %2051 = vmatprep.subr.mxu0 %v1133
  %2052 = vmatpush1.msra.mxu0 %v1132
  %2053 = vmatprep.subr.mxu0 %v1131
  %2054 = vmatpush1.msra.mxu0 %v1130
  %2055 = vmatprep.subr.mxu0 %v1129
  %2056 = vmatpush1.msra.mxu0 %v1128
  %2057 = vmatprep.subr.mxu0 %v1127
  %2058 = vmatpush1.msra.mxu0 %v1126
  %2059 = vmatprep.subr.mxu0 %v1125
  %2060 = vmatpush1.msra.mxu0 %v1124
  %2061 = vmatprep.subr.mxu0 %v1123
  %2062 = vmatpush1.msra.mxu0 %v1122
  %2063 = vmatprep.subr.mxu0 0.0
  %2064 = vmatpush2.msra.mxu0 0.0
  %2065 = vmatprep.subr.mxu0 0.0
  %2066 = vmatpush2.msra.mxu0 0.0
  %2067 = vmatprep.subr.mxu0 0.0
  %2068 = vmatpush2.msra.mxu0 0.0
  %2069 = vmatprep.subr.mxu0 0.0
  %2070 = vmatpush2.msra.mxu0 0.0
  %2071 = vmatprep.subr.mxu0 0.0
  %2072 = vmatpush2.msra.mxu0 0.0
  %2073 = vmatprep.subr.mxu0 0.0
  %2074 = vmatpush2.msra.mxu0 0.0
  %2075 = vmatprep.subr.mxu0 0.0
  %2076 = vmatpush2.msra.mxu0 0.0
  %2077 = vmatprep.subr.mxu0 0.0
  %2078 = vmatpush2.msra.mxu0 0.0
  %2079 = vmatprep.subr.mxu0 0.0
  %2080 = vmatpush2.msra.mxu0 0.0
  %2081 = vmatprep.subr.mxu0 0.0
  %2082 = vmatpush2.msra.mxu0 0.0
  %2083 = vmatprep.subr.mxu0 0.0
  %2084 = vmatpush2.msra.mxu0 0.0
  %2085 = vmatprep.subr.mxu0 0.0
  %2086 = vmatpush2.msra.mxu0 0.0
  %2087 = vmatprep.subr.mxu0 0.0
  %2088 = vmatpush2.msra.mxu0 0.0
  %2089 = vmatprep.subr.mxu0 0.0
  %2090 = vmatpush2.msra.mxu0 0.0
  %2091 = vmatprep.subr.mxu0 0.0
  %2092 = vmatpush2.msra.mxu0 0.0
  %2093 = vmatprep.subr.mxu0 0.0
  %2094 = vmatpush2.msra.mxu0 0.0
  %2095 = vmatprep.mubr.f32.mxu0 0.0
  %2096 = vmatmul.mubr.f32.gmra.mxu0 %v2029
  %v2097 = vpop.f32.mrf.mxu0
  %v2098 = vadd.f32 0.0, %v2097
  %v2099 = vpop.f32.mrf.mxu0
  %v2100 = vadd.f32 0.0, %v2099
  %2101 = vdwg.mxu0
  %v2104 = vrot.slane %v2098, 2
  %v2105 = vrot.slane %v2100, 2
  %v2108 = vadd.f32 %v2024, %v2104
  %v2109 = vadd.f32 %v2025, %v2105
  %v2110 = vxor.u32 %v2108, 2147483648
  %v2111 = vxor.u32 %v2109, 2147483648
  %v2112 = vmul.f32 %v2110, 1.442695
  %v2113 = vpow.pop %v2112
  %v2114 = vmul.f32 %v2111, 1.442695
  %v2115 = vpow.pop %v2114
  %v2116 = vadd.f32 %v2113, 1.0
  %v2117 = vadd.f32 %v2115, 1.0
  %v2118 = vrcp.pop %v2116
  %v2119 = vmul.f32 1.0, %v2118
  %v2120 = vrcp.pop %v2117
  %v2121 = vmul.f32 1.0, %v2120
  %v2122 = vtanh.pop %v2109
  %v2124 = vrot.slane %v2015, 6
  %v2126 = vmul.f32 %v2119, %v2124
  %v2127 = vmul.f32 %v2119, %v2122
  %2129 = vrot.lane.b32.xlu0 %v2127, 64
  %v2130 = vpop.permute.xlu0 %2129
  %v2132 = vadd.f32 %v2126, %v2130
  %v2133 = vtanh.pop %v2132
  %v2134 = vmul.f32 %v2121, %v2133
  %2136 = vrot.lane.b32.xlu0 %v2134, 64
  %v2137 = vpop.permute.xlu0 %2136
  %2139 = vst.msk [vmem:[#allocation3 + $0x8] sm:$0xc0] %vm625, %v2137
  %2140 = vst.msk [vmem:[#allocation3 - $0x6] sm:$0xc0] %vm627, %v2134
  %v2141 = vld [vmem:[#allocation3] sm:$0xff]
  %v2142 = vld [vmem:[#allocation3 + $0x8] sm:$0xff]
  %v2143 = vld [vmem:[%s7] sm:$0xff]
  %v2144 = vld [vmem:[%s7 + $0x8] sm:$0xff]
  %v2145 = vld [vmem:[%s7 + $0x10] sm:$0xff]
  %v2146 = vld [vmem:[%s7 + $0x18] sm:$0xff]
  %v2147 = vld [vmem:[%s7 + $0x20] sm:$0xff]
  %v2148 = vld [vmem:[%s7 + $0x28] sm:$0xff]
  %v2149 = vld [vmem:[%s7 + $0x30] sm:$0xff]
  %v2150 = vld [vmem:[%s7 + $0x38] sm:$0xff]
  %v2151 = vld [vmem:[%s7 + $0x40] sm:$0xff]
  %v2152 = vld [vmem:[%s7 + $0x48] sm:$0xff]
  %v2153 = vld [vmem:[%s7 + $0x50] sm:$0xff]
  %v2154 = vld [vmem:[%s7 + $0x58] sm:$0xff]
  %v2155 = vld [vmem:[%s7 + $0x60] sm:$0xff]
  %v2156 = vld [vmem:[%s7 + $0x68] sm:$0xff]
  %v2157 = vld [vmem:[%s7 + $0x70] sm:$0xff]
  %v2158 = vld [vmem:[%s7 + $0x78] sm:$0xff]
  %v2159 = vld [vmem:[%s8] sm:$0x1]
  %v2161 = vlaneseq
  %v2162 = vshrl.u32 %v2161, 7
  %v2163 = vsub.s32 0, %v2162
  %v2164 = vrot.slane %v2159, %v2163
  %2166 = vmatprep.subr.mxu0 0.0
  %2167 = vmatpush1.msra.mxu0 %v2158
  %2168 = vmatprep.subr.mxu0 0.0
  %2169 = vmatpush1.msra.mxu0 %v2157
  %2170 = vmatprep.subr.mxu0 0.0
  %2171 = vmatpush1.msra.mxu0 %v2156
  %2172 = vmatprep.subr.mxu0 0.0
  %2173 = vmatpush1.msra.mxu0 %v2155
  %2174 = vmatprep.subr.mxu0 0.0
  %2175 = vmatpush1.msra.mxu0 %v2154
  %2176 = vmatprep.subr.mxu0 0.0
  %2177 = vmatpush1.msra.mxu0 %v2153
  %2178 = vmatprep.subr.mxu0 0.0
  %2179 = vmatpush1.msra.mxu0 %v2152
  %2180 = vmatprep.subr.mxu0 0.0
  %2181 = vmatpush1.msra.mxu0 %v2151
  %2182 = vmatprep.subr.mxu0 0.0
  %2183 = vmatpush1.msra.mxu0 %v2150
  %2184 = vmatprep.subr.mxu0 0.0
  %2185 = vmatpush1.msra.mxu0 %v2149
  %2186 = vmatprep.subr.mxu0 0.0
  %2187 = vmatpush1.msra.mxu0 %v2148
  %2188 = vmatprep.subr.mxu0 0.0
  %2189 = vmatpush1.msra.mxu0 %v2147
  %2190 = vmatprep.subr.mxu0 0.0
  %2191 = vmatpush1.msra.mxu0 %v2146
  %2192 = vmatprep.subr.mxu0 0.0
  %2193 = vmatpush1.msra.mxu0 %v2145
  %2194 = vmatprep.subr.mxu0 0.0
  %2195 = vmatpush1.msra.mxu0 %v2144
  %2196 = vmatprep.subr.mxu0 0.0
  %2197 = vmatpush1.msra.mxu0 %v2143
  %2198 = vmatprep.subr.mxu0 0.0
  %2199 = vmatpush2.msra.mxu0 0.0
  %2200 = vmatprep.subr.mxu0 0.0
  %2201 = vmatpush2.msra.mxu0 0.0
  %2202 = vmatprep.subr.mxu0 0.0
  %2203 = vmatpush2.msra.mxu0 0.0
  %2204 = vmatprep.subr.mxu0 0.0
  %2205 = vmatpush2.msra.mxu0 0.0
  %2206 = vmatprep.subr.mxu0 0.0
  %2207 = vmatpush2.msra.mxu0 0.0
  %2208 = vmatprep.subr.mxu0 0.0
  %2209 = vmatpush2.msra.mxu0 0.0
  %2210 = vmatprep.subr.mxu0 0.0
  %2211 = vmatpush2.msra.mxu0 0.0
  %2212 = vmatprep.subr.mxu0 0.0
  %2213 = vmatpush2.msra.mxu0 0.0
  %2214 = vmatprep.subr.mxu0 0.0
  %2215 = vmatpush2.msra.mxu0 0.0
  %2216 = vmatprep.subr.mxu0 0.0
  %2217 = vmatpush2.msra.mxu0 0.0
  %2218 = vmatprep.subr.mxu0 0.0
  %2219 = vmatpush2.msra.mxu0 0.0
  %2220 = vmatprep.subr.mxu0 0.0
  %2221 = vmatpush2.msra.mxu0 0.0
  %2222 = vmatprep.subr.mxu0 0.0
  %2223 = vmatpush2.msra.mxu0 0.0
  %2224 = vmatprep.subr.mxu0 0.0
  %2225 = vmatpush2.msra.mxu0 0.0
  %2226 = vmatprep.subr.mxu0 0.0
  %2227 = vmatpush2.msra.mxu0 0.0
  %2228 = vmatprep.subr.mxu0 0.0
  %2229 = vmatpush2.msra.mxu0 0.0
  %2230 = vmatprep.mubr.f32.mxu0 0.0
  %2231 = vmatmul.mubr.f32.gmra.mxu0 %v2141
  %v2232 = vpop.f32.mrf.mxu0
  %v2233 = vadd.f32 %v2164, %v2232
  %v2234 = vpop.f32.mrf.mxu0
  %2235 = vmatprep.mubr.f32.mxu0 0.0
  %2236 = vmatmul.mubr.f32.gmra.mxu0 %v2142
  %v2237 = vpop.f32.mrf.mxu0
  %v2238 = vadd.f32 %v2164, %v2237
  %v2239 = vpop.f32.mrf.mxu0
  %2240 = vdwg.mxu0
  %v2241 = vmax.f32 %v2233, 0.0
  %v2242 = vmax.f32 %v2238, 0.0
  %v2243 = vld [vmem:[%s9] sm:$0x1]
  %v2245 = vlaneseq
  %v2246 = vshrl.u32 %v2245, 7
  %v2247 = vsub.s32 0, %v2246
  %v2248 = vrot.slane %v2243, %v2247
  %v2250 = vmul.f32 %v2241, %v2248
  %v2251 = vmul.f32 %v2242, %v2248
  %v2252 = vsel %vm168, %v2250, 0.0
  %2253 = vadd.xlane.f32.xlu0 %v2252
  %v2254 = vpop.xlane.xlu0 %2253
  %v2255 = vsel %vm168, %v2251, 0.0
  %2256 = vadd.xlane.f32.xlu0 %v2255
  %v2257 = vpop.xlane.xlu0 %2256
  %v2258 = vld [vmem:[#allocation4] sm:$0x1]
  %v2260 = vlaneseq
  %v2261 = vshrl.u32 %v2260, 7
  %v2262 = vsub.s32 0, %v2261
  %v2263 = vrot.slane %v2258, %v2262
  %v2265 = vadd.f32 %v2254, %v2263
  %v2266 = vadd.f32 %v2257, %v2263
  %v2267 = vxor.u32 %v2265, 2147483648
  %v2268 = vxor.u32 %v2266, 2147483648
  %v2269 = vmul.f32 %v2267, 1.442695
  %v2270 = vpow.pop %v2269
  %v2271 = vmul.f32 %v2268, 1.442695
  %v2272 = vpow.pop %v2271
  %v2273 = vadd.f32 %v2270, 1.0
  %v2274 = vadd.f32 %v2272, 1.0
  %v2275 = vrcp.pop %v2273
  %v2276 = vmul.f32 1.0, %v2275
  %v2277 = vrcp.pop %v2274
  %v2278 = vmul.f32 1.0, %v2277
  %vm2279 = vcmask 7168
  %2280 = vst.msk [vmem:[%s11] sm:$0xff] %vm2279, %v2276
  %2281 = vst.msk [vmem:[%s11 + $0x8] sm:$0xff] %vm2279, %v2278
  // Predicated region
  $region46: #{bidirectional_lstm_forward.1} parent=0 // pred_check
    _
  $region47: #{bidirectional_lstm_forward.1} parent=0 // pred_check_branch
    %2283 = sbr.rel (0) target = $region49
  $region48: #{bidirectional_lstm_forward.1} parent=0 // pred_region
    _
  $region49: #{bidirectional_lstm_forward.1} parent=0 // pred_fallthru
    _
  // Predicated region
  $region50: #{bidirectional_lstm_forward.1} parent=0 // pred_check
    _
  $region51: #{bidirectional_lstm_forward.1} parent=0 // pred_check_branch
    %2285 = sbr.rel (0) target = $region53
  $region52: #{bidirectional_lstm_forward.1} parent=0 // pred_region
    _
  $region53: #{bidirectional_lstm_forward.1} parent=0 // pred_fallthru
    _

</llo_original>
